<compile_context>
chip_gen: v7x
topology: tpu7x:2x2x1
jax: 0.10.0
libtpu: 0.0.40
codegen_flags: <defaults>
</compile_context>

<pallas_src>
import functools

import jax
import jax.numpy as jnp
from jax.experimental import pallas as pl
from jax.experimental.pallas import tpu as pltpu


# ----------------------------- linear encoder ------------------------------ #

def _linear_kernel(x_ref, w_ref, b_ref, o_ref, *, activation):
    y = jnp.dot(x_ref[...], w_ref[...], preferred_element_type=jnp.float32)
    y = y + b_ref[...]
    if activation == "relu":
        y = jnp.maximum(y, 0.0)
    o_ref[...] = y.astype(o_ref.dtype)


def pallas_linear(x, w, b, activation=None, tile_m=512):
    """(M, K) @ (K, N) + b (+ relu), tiled over M so DMA overlaps compute and
    the per-step VMEM footprint stays bounded (v7x: 64 MiB).  MXU operands are
    cast to bf16; accumulation and bias/relu stay f32."""
    M, K = x.shape
    N = w.shape[1]
    tm = M if M <= tile_m else tile_m
    if tm != M and tm % 8 != 0:          # block sublane dim: multiple of 8
        tm = max(8, (tm // 8) * 8)
    kern = functools.partial(_linear_kernel, activation=activation)
    return pl.pallas_call(
        kern,
        out_shape=jax.ShapeDtypeStruct((M, N), jnp.float32),
        grid=(pl.cdiv(M, tm),),
        in_specs=[pl.BlockSpec((tm, K), lambda i: (i, 0)),
                  pl.BlockSpec((K, N), lambda i: (0, 0)),
                  pl.BlockSpec((1, N), lambda i: (0, 0))],
        out_specs=pl.BlockSpec((tm, N), lambda i: (i, 0)),
        compiler_params=pltpu.CompilerParams(
            dimension_semantics=("parallel",)),
    )(x.astype(jnp.bfloat16), w.astype(jnp.bfloat16), b.astype(jnp.float32))


# ------------------- fused prop / fusion / conv / predict ------------------ #

def _fused_map_score_kernel(cs_s_ref, cs_e_ref, inv_ref, m2_ref, txt_ref,
                            wmap_ref, wmc_ref, bmc_ref, wpred_ref, bpred_ref,
                            gt_ref, score_ref, lnum_ref, lden_ref):
    ti = pl.program_id(1)
    TN = score_ref.shape[1]
    N = score_ref.shape[2]
    D = cs_e_ref.shape[2]
    PT = TN * N

    @pl.when(ti == 0)
    def _():
        lnum_ref[...] = jnp.zeros_like(lnum_ref)
        lden_ref[...] = jnp.zeros_like(lden_ref)

    starts = cs_s_ref[0]          # (TN, D) prefix sum before clip i
    ends = cs_e_ref[0]            # (N, D)  prefix sum through clip j
    inv3 = inv_ref[...]           # (TN, N, 1): 1/(j-i+1) if j>=i else 0
    mask2 = m2_ref[...]           # (TN, N):   1.0 if j>=i else 0.0

    # prop_module: proposal-map row tile via prefix-sum differences
    # (vectorized; map_h never touches HBM).
    map3 = (ends[None, :, :] - starts[:, None, :]) * inv3      # (TN, N, D)
    valid3 = (inv3 > 0.0).astype(jnp.float32)                  # (TN, N, 1)

    # fusion_module: (map @ W_map) ⊙ txt, relu, mask  (bf16 MXU, f32 acc)
    mp = jnp.dot(map3.reshape(PT, D).astype(jnp.bfloat16), wmap_ref[...],
                 preferred_element_type=jnp.float32).reshape(TN, N, D)
    fused3 = jnp.maximum(mp * txt_ref[...], 0.0) * valid3

    # map_conv: pointwise conv + relu, masked  (bf16 MXU, f32 acc)
    mc = jnp.dot(fused3.reshape(PT, D).astype(jnp.bfloat16), wmc_ref[...],
                 preferred_element_type=jnp.float32).reshape(TN, N, D)
    mc3 = jnp.maximum(mc + bmc_ref[...], 0.0) * valid3

    # predicter: Conv2d(D, 1, 1, 1) == per-position dot with a (1, D) weight.
    # Done as VPU multiply + lane reduction (an N=1 MXU matmul would waste the
    # systolic array), result kept lane-dense as (TN, N).
    logits = jnp.sum(mc3 * wpred_ref[...], axis=-1) + bpred_ref[...]  # (TN, N)
    score2 = jax.nn.sigmoid(logits) * mask2
    score_ref[0] = score2.astype(score_ref.dtype)

    # criterion: masked BCE partial sums, accumulated across row tiles.
    gt = gt_ref[0]                                               # (TN, N)
    eps = 1e-6
    sc = jnp.clip(score2, eps, 1.0 - eps)
    bce = -(gt * jnp.log(sc) + (1.0 - gt) * jnp.log(1.0 - sc))
    lnum_ref[...] += jnp.sum(bce * mask2)
    lden_ref[...] += jnp.sum(mask2)


def pallas_tan_map_head(cs_starts, cs_ends, inv_col, mask2d, txt_proj,
                        w_f_map, w_mc, b_mc, w_pred, b_pred, gt_map):
    B, N, D = cs_ends.shape
    TN = 8 if N % 8 == 0 else N          # row tile of the NxN proposal map
    n_tiles = N // TN
    return pl.pallas_call(
        _fused_map_score_kernel,
        out_shape=(jax.ShapeDtypeStruct((B, N, N), jnp.float32),
                   jax.ShapeDtypeStruct((B, 1, 1), jnp.float32),
                   jax.ShapeDtypeStruct((B, 1, 1), jnp.float32)),
        grid=(B, n_tiles),
        in_specs=[
            pl.BlockSpec((1, TN, D), lambda b, t: (b, t, 0)),   # cs_starts
            pl.BlockSpec((1, N, D), lambda b, t: (b, 0, 0)),    # cs_ends
            pl.BlockSpec((TN, N, 1), lambda b, t: (t, 0, 0)),   # inv_col
            pl.BlockSpec((TN, N), lambda b, t: (t, 0)),         # mask2d
            pl.BlockSpec((1, 1, D), lambda b, t: (b, 0, 0)),    # txt_proj
            pl.BlockSpec((D, D), lambda b, t: (0, 0)),          # w_f_map
            pl.BlockSpec((D, D), lambda b, t: (0, 0)),          # w_mc
            pl.BlockSpec((1, D), lambda b, t: (0, 0)),          # b_mc
            pl.BlockSpec((1, D), lambda b, t: (0, 0)),          # w_pred
            pl.BlockSpec((1, 1), lambda b, t: (0, 0)),          # b_pred
            pl.BlockSpec((1, TN, N), lambda b, t: (b, t, 0)),   # gt_map
        ],
        out_specs=(
            pl.BlockSpec((1, TN, N), lambda b, t: (b, t, 0)),   # score
            pl.BlockSpec((1, 1, 1), lambda b, t: (b, 0, 0)),    # loss numerator
            pl.BlockSpec((1, 1, 1), lambda b, t: (b, 0, 0)),    # loss denom
        ),
        compiler_params=pltpu.CompilerParams(
            dimension_semantics=("parallel", "arbitrary")),
    )(cs_starts, cs_ends, inv_col, mask2d, txt_proj,
      w_f_map, w_mc, b_mc, w_pred, b_pred, gt_map)


# ---------------------------- params & forward ------------------------------ #

def init_params(key, vocab, Dt, C_in, D):
    ks = jax.random.split(key, 7)
    s = 0.05
    return dict(
        embed=jax.random.normal(ks[0], (vocab, Dt), jnp.float32) * s,
        w_txt=jax.random.normal(ks[1], (Dt, Dt), jnp.float32) * s,
        b_txt=jnp.zeros((1, Dt), jnp.float32),
        w_vid=jax.random.normal(ks[2], (C_in, D), jnp.float32) * s,
        b_vid=jnp.zeros((1, D), jnp.float32),
        w_f_txt=jax.random.normal(ks[3], (Dt, D), jnp.float32) * s,
        w_f_map=jax.random.normal(ks[4], (D, D), jnp.float32) * s,
        w_mc=jax.random.normal(ks[5], (D, D), jnp.float32) * s,
        b_mc=jnp.zeros((1, D), jnp.float32),
        w_pred=jax.random.normal(ks[6], (1, D), jnp.float32) * s,
        b_pred=jnp.zeros((1, 1), jnp.float32),
    )


def tan_forward(params, txt_inds, txt_mask, vid_feat, se_times, gt_map):
    B, T, C_in = vid_feat.shape
    N = T
    D = params["w_vid"].shape[1]

    # text_encoder: embedding lookup (glue gather) + tiled linear + relu.
    txt_emb = params["embed"][txt_inds]                       # (B, L, Dt)
    _, L, Dt = txt_emb.shape
    txt_feat = pallas_linear(txt_emb.reshape(B * L, Dt),
                             params["w_txt"], params["b_txt"],
                             activation="relu").reshape(B, L, Dt)
    txt_mask_f = txt_mask.astype(jnp.float32)[..., None]      # (B, L, 1)

    # fusion_module text branch: masked mean-pool + projection.  Tiny
    # (B x Dt x D) work -> plain JAX rather than a dedicated pallas_call.
    pooled = jnp.sum(txt_feat * txt_mask_f, axis=1)
    pooled = pooled / jnp.maximum(jnp.sum(txt_mask_f, axis=1), 1.0)  # (B, Dt)
    txt_proj = (pooled @ params["w_f_txt"]).reshape(B, 1, D)

    # video_encoder: 1x1 temporal conv == tiled channel matmul.
    vis_h = pallas_linear(vid_feat.reshape(B * T, C_in),
                          params["w_vid"], params["b_vid"],
                          activation="relu").reshape(B, T, D)

    # prop_module prefix sums (f32 cumsum is fine at these T; for very long
    # clips consider a compensated sum).
    cs = jnp.concatenate(
        [jnp.zeros((B, 1, D), jnp.float32), jnp.cumsum(vis_h, axis=1)], axis=1)
    cs_starts = cs[:, :N, :]                                   # (B, N, D)
    cs_ends = cs[:, 1:, :]                                     # (B, N, D)

    # Deterministic triangular validity / 1-over-length maps (plain JAX).
    idx_i = jnp.arange(N)[:, None]
    idx_j = jnp.arange(N)[None, :]
    valid = idx_j >= idx_i
    inv_col = jnp.where(
        valid, 1.0 / (idx_j - idx_i + 1).astype(jnp.float32), 0.0)[..., None]
    mask2d = valid.astype(jnp.float32)

    # Fused prop -> fusion -> map_conv -> predicter -> masked BCE.
    score, lnum, lden = pallas_tan_map_head(
        cs_starts, cs_ends, inv_col, mask2d, txt_proj,
        params["w_f_map"].astype(jnp.bfloat16),
        params["w_mc"].astype(jnp.bfloat16),
        params["b_mc"], params["w_pred"], params["b_pred"],
        gt_map.astype(jnp.float32))

    loss = jnp.sum(lnum) / jnp.maximum(jnp.sum(lden), 1.0)
    score_nchw = score[:, None, :, :]                          # (B, 1, N, N)

    # TODO(synk): eval-time NMS over (se_times, score) is data-dependent
    # sorting/suppression with no clean Pallas equivalent; training path only.
    return {"loss": loss, "score": score_nchw}


# --------------------------------- main ------------------------------------ #

if __name__ == "__main__":
    B, T, C_in, D, L, V, Dt = 2, 16, 16, 128, 8, 100, 64

    key = jax.random.PRNGKey(0)
    k1, k2, k3 = jax.random.split(key, 3)

    txt_inds = jax.random.randint(k1, (B, L), 0, V)
    lens = jnp.maximum(L - 3 * jnp.arange(B), 1)
    txt_mask = (jnp.arange(L)[None, :] < lens[:, None]).astype(jnp.int32)
    vid_feat = jax.random.normal(k2, (B, T, C_in), jnp.float32)

    # proposal (start, end) times: only consumed by the eval-time NMS branch.
    t_idx = jnp.arange(T, dtype=jnp.float32)
    se_times = jnp.stack(
        [jnp.broadcast_to(t_idx[:, None], (T, T)),
         jnp.broadcast_to(t_idx[None, :] + 1.0, (T, T))], axis=-1)
    se_times = jnp.broadcast_to(se_times[None], (B, T, T, 2))

    gt_map = jax.random.uniform(k3, (B, T, T), jnp.float32)

    params = init_params(jax.random.PRNGKey(42), V, Dt, C_in, D)

    fwd = jax.jit(functools.partial(tan_forward, params))
    out = fwd(txt_inds, txt_mask, vid_feat, se_times, gt_map)
    jax.block_until_ready(out)

    assert out["loss"].shape == ()
    assert out["score"].shape == (B, 1, T, T)
    print("KERNEL_OK")
</pallas_src>

<mosaic_0001>
module attributes {stable_mosaic.version = 11 : i64} {
  func.func @_linear_kernel(%arg0: i32, %arg1: memref<16x64xbf16, #tpu.memory_space<vmem>>, %arg2: memref<64x64xbf16, #tpu.memory_space<vmem>>, %arg3: memref<1x64xf32, #tpu.memory_space<vmem>>, %arg4: memref<16x64xf32, #tpu.memory_space<vmem>>) attributes {dimension_semantics = [#tpu.dimension_semantics<parallel>], iteration_bounds = array<i64: 1>, scalar_prefetch = 0 : i64, scratch_operands = 0 : i64, tpu.core_type = #tpu.core_type<tc>, window_params = [{transform_indices = @transform_0, window_bounds = array<i64: 16, 64>}, {pipeline_mode = #tpu.pipeline_mode<synchronous>, transform_indices = @transform_1, window_bounds = array<i64: 64, 64>}, {pipeline_mode = #tpu.pipeline_mode<synchronous>, transform_indices = @transform_2, window_bounds = array<i64: 1, 64>}, {transform_indices = @transform_3, window_bounds = array<i64: 16, 64>}]} {
    %c0 = arith.constant 0 : index
    %c0_0 = arith.constant 0 : index
    %0 = vector.load %arg1[%c0, %c0_0] : memref<16x64xbf16, #tpu.memory_space<vmem>>, vector<16x64xbf16>
    %c0_1 = arith.constant 0 : index
    %c0_2 = arith.constant 0 : index
    %1 = vector.load %arg2[%c0_1, %c0_2] : memref<64x64xbf16, #tpu.memory_space<vmem>>, vector<64x64xbf16>
    %cst = arith.constant dense<0.000000e+00> : vector<16x64xf32>
    %2 = tpu.matmul %0, %1, %cst {dimension_numbers = #tpu.dot_dimension_numbers<[1], [0], [0], [1], [0, 0, 1, 1], [], []>} : vector<16x64xbf16>, vector<64x64xbf16>, vector<16x64xf32> -> vector<16x64xf32>
    %c0_3 = arith.constant 0 : index
    %c0_4 = arith.constant 0 : index
    %3 = vector.load %arg3[%c0_3, %c0_4] : memref<1x64xf32, #tpu.memory_space<vmem>>, vector<1x64xf32>
    %4 = vector.broadcast %3 : vector<1x64xf32> to vector<16x64xf32>
    %5 = arith.addf %2, %4 : vector<16x64xf32>
    %cst_5 = arith.constant 0.000000e+00 : f32
    %6 = vector.broadcast %cst_5 : f32 to vector<16x64xf32>
    %7 = arith.maximumf %5, %6 : vector<16x64xf32>
    %c0_6 = arith.constant 0 : index
    %c0_7 = arith.constant 0 : index
    %8 = vector.load %arg4[%c0_6, %c0_7] : memref<16x64xf32, #tpu.memory_space<vmem>>, vector<16x64xf32>
    tpu.vector_store %arg4[%c0_6, %c0_7], %7 {strides = array<i32>} : memref<16x64xf32, #tpu.memory_space<vmem>>, vector<16x64xf32>,
    return
  }
  func.func @transform_0(%arg0: i32) -> (i32, i32) {
    %c0_i32 = arith.constant 0 : i32
    %c0_i32_0 = arith.constant 0 : i32
    return %arg0, %c0_i32 : i32, i32
  }
  func.func @transform_1(%arg0: i32) -> (i32, i32) {
    %c0_i32 = arith.constant 0 : i32
    %c0_i32_0 = arith.constant 0 : i32
    %c0_i32_1 = arith.constant 0 : i32
    return %c0_i32, %c0_i32_0 : i32, i32
  }
  func.func @transform_2(%arg0: i32) -> (i32, i32) {
    %c0_i32 = arith.constant 0 : i32
    %c0_i32_0 = arith.constant 0 : i32
    %c0_i32_1 = arith.constant 0 : i32
    return %c0_i32, %c0_i32_0 : i32, i32
  }
  func.func @transform_3(%arg0: i32) -> (i32, i32) {
    %c0_i32 = arith.constant 0 : i32
    %c0_i32_0 = arith.constant 0 : i32
    return %arg0, %c0_i32 : i32, i32
  }
}

module attributes {stable_mosaic.version = 11 : i64} {
  func.func @_linear_kernel(%arg0: i32, %arg1: memref<32x16xbf16, #tpu.memory_space<vmem>>, %arg2: memref<16x128xbf16, #tpu.memory_space<vmem>>, %arg3: memref<1x128xf32, #tpu.memory_space<vmem>>, %arg4: memref<32x128xf32, #tpu.memory_space<vmem>>) attributes {dimension_semantics = [#tpu.dimension_semantics<parallel>], iteration_bounds = array<i64: 1>, scalar_prefetch = 0 : i64, scratch_operands = 0 : i64, tpu.core_type = #tpu.core_type<tc>, window_params = [{transform_indices = @transform_0, window_bounds = array<i64: 32, 16>}, {pipeline_mode = #tpu.pipeline_mode<synchronous>, transform_indices = @transform_1, window_bounds = array<i64: 16, 128>}, {pipeline_mode = #tpu.pipeline_mode<synchronous>, transform_indices = @transform_2, window_bounds = array<i64: 1, 128>}, {transform_indices = @transform_3, window_bounds = array<i64: 32, 128>}]} {
    %c0 = arith.constant 0 : index
    %c0_0 = arith.constant 0 : index
    %0 = vector.load %arg1[%c0, %c0_0] : memref<32x16xbf16, #tpu.memory_space<vmem>>, vector<32x16xbf16>
    %c0_1 = arith.constant 0 : index
    %c0_2 = arith.constant 0 : index
    %1 = vector.load %arg2[%c0_1, %c0_2] : memref<16x128xbf16, #tpu.memory_space<vmem>>, vector<16x128xbf16>
    %cst = arith.constant dense<0.000000e+00> : vector<32x128xf32>
    %2 = tpu.matmul %0, %1, %cst {dimension_numbers = #tpu.dot_dimension_numbers<[1], [0], [0], [1], [0, 0, 1, 1], [], []>} : vector<32x16xbf16>, vector<16x128xbf16>, vector<32x128xf32> -> vector<32x128xf32>
    %c0_3 = arith.constant 0 : index
    %c0_4 = arith.constant 0 : index
    %3 = vector.load %arg3[%c0_3, %c0_4] : memref<1x128xf32, #tpu.memory_space<vmem>>, vector<1x128xf32>
    %4 = vector.broadcast %3 : vector<1x128xf32> to vector<32x128xf32>
    %5 = arith.addf %2, %4 : vector<32x128xf32>
    %cst_5 = arith.constant 0.000000e+00 : f32
    %6 = vector.broadcast %cst_5 : f32 to vector<32x128xf32>
    %7 = arith.maximumf %5, %6 : vector<32x128xf32>
    %c0_6 = arith.constant 0 : index
    %c0_7 = arith.constant 0 : index
    %8 = vector.load %arg4[%c0_6, %c0_7] : memref<32x128xf32, #tpu.memory_space<vmem>>, vector<32x128xf32>
    tpu.vector_store %arg4[%c0_6, %c0_7], %7 {strides = array<i32>} : memref<32x128xf32, #tpu.memory_space<vmem>>, vector<32x128xf32>,
    return
  }
  func.func @transform_0(%arg0: i32) -> (i32, i32) {
    %c0_i32 = arith.constant 0 : i32
    %c0_i32_0 = arith.constant 0 : i32
    return %arg0, %c0_i32 : i32, i32
  }
  func.func @transform_1(%arg0: i32) -> (i32, i32) {
    %c0_i32 = arith.constant 0 : i32
    %c0_i32_0 = arith.constant 0 : i32
    %c0_i32_1 = arith.constant 0 : i32
    return %c0_i32, %c0_i32_0 : i32, i32
  }
  func.func @transform_2(%arg0: i32) -> (i32, i32) {
    %c0_i32 = arith.constant 0 : i32
    %c0_i32_0 = arith.constant 0 : i32
    %c0_i32_1 = arith.constant 0 : i32
    return %c0_i32, %c0_i32_0 : i32, i32
  }
  func.func @transform_3(%arg0: i32) -> (i32, i32) {
    %c0_i32 = arith.constant 0 : i32
    %c0_i32_0 = arith.constant 0 : i32
    return %arg0, %c0_i32 : i32, i32
  }
}

module attributes {stable_mosaic.version = 11 : i64} {
  func.func @_fused_map_score_kernel(%arg0: i32, %arg1: i32, %arg2: memref<1x8x128xf32, #tpu.memory_space<vmem>>, %arg3: memref<1x16x128xf32, #tpu.memory_space<vmem>>, %arg4: memref<8x16x1xf32, #tpu.memory_space<vmem>>, %arg5: memref<8x16xf32, #tpu.memory_space<vmem>>, %arg6: memref<1x1x128xf32, #tpu.memory_space<vmem>>, %arg7: memref<128x128xbf16, #tpu.memory_space<vmem>>, %arg8: memref<128x128xbf16, #tpu.memory_space<vmem>>, %arg9: memref<1x128xf32, #tpu.memory_space<vmem>>, %arg10: memref<1x128xf32, #tpu.memory_space<vmem>>, %arg11: memref<1x1xf32, #tpu.memory_space<vmem>>, %arg12: memref<1x8x16xf32, #tpu.memory_space<vmem>>, %arg13: memref<1x8x16xf32, #tpu.memory_space<vmem>>, %arg14: memref<1x1x1xf32, #tpu.memory_space<vmem>>, %arg15: memref<1x1x1xf32, #tpu.memory_space<vmem>>) attributes {dimension_semantics = [#tpu.dimension_semantics<parallel>, #tpu.dimension_semantics<arbitrary>], iteration_bounds = array<i64: 2, 2>, scalar_prefetch = 0 : i64, scratch_operands = 0 : i64, tpu.core_type = #tpu.core_type<tc>, window_params = [{transform_indices = @transform_0, window_bounds = array<i64: 1, 8, 128>}, {transform_indices = @transform_1, window_bounds = array<i64: 1, 16, 128>}, {transform_indices = @transform_2, window_bounds = array<i64: 8, 16, 1>}, {transform_indices = @transform_3, window_bounds = array<i64: 8, 16>}, {transform_indices = @transform_4, window_bounds = array<i64: 1, 1, 128>}, {pipeline_mode = #tpu.pipeline_mode<synchronous>, transform_indices = @transform_5, window_bounds = array<i64: 128, 128>}, {pipeline_mode = #tpu.pipeline_mode<synchronous>, transform_indices = @transform_6, window_bounds = array<i64: 128, 128>}, {pipeline_mode = #tpu.pipeline_mode<synchronous>, transform_indices = @transform_7, window_bounds = array<i64: 1, 128>}, {pipeline_mode = #tpu.pipeline_mode<synchronous>, transform_indices = @transform_8, window_bounds = array<i64: 1, 128>}, {pipeline_mode = #tpu.pipeline_mode<synchronous>, transform_indices = @transform_9, window_bounds = array<i64: 1, 1>}, {transform_indices = @transform_10, window_bounds = array<i64: 1, 8, 16>}, {transform_indices = @transform_11, window_bounds = array<i64: 1, 8, 16>}, {transform_indices = @transform_12, window_bounds = array<i64: 1, 1, 1>}, {transform_indices = @transform_13, window_bounds = array<i64: 1, 1, 1>}]} {
    %c0_i32 = arith.constant 0 : i32
    %0 = arith.cmpi eq, %arg1, %c0_i32 : i32
    %1 = arith.extui %0 : i1 to i32
    %c0_i32_0 = arith.constant 0 : i32
    %2 = arith.cmpi ne, %1, %c0_i32_0 : i32
    scf.if %2 {
      %cst_55 = arith.constant 0.000000e+00 : f32
      %96 = vector.broadcast %cst_55 : f32 to vector<1x1x1xf32>
      %c0_56 = arith.constant 0 : index
      %c0_57 = arith.constant 0 : index
      %c0_58 = arith.constant 0 : index
      %97 = vector.load %arg14[%c0_56, %c0_57, %c0_58] : memref<1x1x1xf32, #tpu.memory_space<vmem>>, vector<1x1x1xf32>
      tpu.vector_store %arg14[%c0_56, %c0_57, %c0_58], %96 {strides = array<i32>} : memref<1x1x1xf32, #tpu.memory_space<vmem>>, vector<1x1x1xf32>,
      %cst_59 = arith.constant 0.000000e+00 : f32
      %98 = vector.broadcast %cst_59 : f32 to vector<1x1x1xf32>
      %c0_60 = arith.constant 0 : index
      %c0_61 = arith.constant 0 : index
      %c0_62 = arith.constant 0 : index
      %99 = vector.load %arg15[%c0_60, %c0_61, %c0_62] : memref<1x1x1xf32, #tpu.memory_space<vmem>>, vector<1x1x1xf32>
      tpu.vector_store %arg15[%c0_60, %c0_61, %c0_62], %98 {strides = array<i32>} : memref<1x1x1xf32, #tpu.memory_space<vmem>>, vector<1x1x1xf32>,
    } else {
    }
    %c0 = arith.constant 0 : index
    %c0_1 = arith.constant 0 : index
    %c0_2 = arith.constant 0 : index
    %3 = vector.load %arg2[%c0, %c0_1, %c0_2] : memref<1x8x128xf32, #tpu.memory_space<vmem>>, vector<1x8x128xf32>
    %4 = vector.shape_cast %3 : vector<1x8x128xf32> to vector<8x128xf32>
    %c0_3 = arith.constant 0 : index
    %c0_4 = arith.constant 0 : index
    %c0_5 = arith.constant 0 : index
    %5 = vector.load %arg3[%c0_3, %c0_4, %c0_5] : memref<1x16x128xf32, #tpu.memory_space<vmem>>, vector<1x16x128xf32>
    %6 = vector.shape_cast %5 : vector<1x16x128xf32> to vector<16x128xf32>
    %c0_6 = arith.constant 0 : index
    %c0_7 = arith.constant 0 : index
    %c0_8 = arith.constant 0 : index
    %7 = vector.load %arg4[%c0_6, %c0_7, %c0_8] : memref<8x16x1xf32, #tpu.memory_space<vmem>>, vector<8x16x1xf32>
    %c0_9 = arith.constant 0 : index
    %c0_10 = arith.constant 0 : index
    %8 = vector.load %arg5[%c0_9, %c0_10] : memref<8x16xf32, #tpu.memory_space<vmem>>, vector<8x16xf32>
    %9 = vector.shape_cast %6 : vector<16x128xf32> to vector<1x16x128xf32>
    %10 = vector.shape_cast %4 : vector<8x128xf32> to vector<8x1x128xf32>
    %11 = vector.broadcast %9 : vector<1x16x128xf32> to vector<8x16x128xf32>
    %12 = vector.broadcast %10 : vector<8x1x128xf32> to vector<8x16x128xf32>
    %13 = arith.subf %11, %12 : vector<8x16x128xf32>
    %14 = vector.broadcast %7 : vector<8x16x1xf32> to vector<8x16x128xf32>
    %15 = arith.mulf %13, %14 : vector<8x16x128xf32>
    %cst = arith.constant 0.000000e+00 : f32
    %16 = vector.broadcast %cst : f32 to vector<8x16x1xf32>
    %17 = arith.cmpf ogt, %7, %16 : vector<8x16x1xf32>
    %18 = arith.extui %17 : vector<8x16x1xi1> to vector<8x16x1xi32>
    %19 = arith.sitofp %18 : vector<8x16x1xi32> to vector<8x16x1xf32>
    %20 = vector.shape_cast %15 : vector<8x16x128xf32> to vector<128x128xf32>
    %21 = arith.truncf %20 : vector<128x128xf32> to vector<128x128xbf16>
    %c0_11 = arith.constant 0 : index
    %c0_12 = arith.constant 0 : index
    %22 = vector.load %arg7[%c0_11, %c0_12] : memref<128x128xbf16, #tpu.memory_space<vmem>>, vector<128x128xbf16>
    %cst_13 = arith.constant dense<0.000000e+00> : vector<128x128xf32>
    %23 = tpu.matmul %21, %22, %cst_13 {dimension_numbers = #tpu.dot_dimension_numbers<[1], [0], [0], [1], [0, 0, 1, 1], [], []>} : vector<128x128xbf16>, vector<128x128xbf16>, vector<128x128xf32> -> vector<128x128xf32>
    %24 = vector.shape_cast %23 : vector<128x128xf32> to vector<8x16x128xf32>
    %c0_14 = arith.constant 0 : index
    %c0_15 = arith.constant 0 : index
    %c0_16 = arith.constant 0 : index
    %25 = vector.load %arg6[%c0_14, %c0_15, %c0_16] : memref<1x1x128xf32, #tpu.memory_space<vmem>>, vector<1x1x128xf32>
    %26 = vector.broadcast %25 : vector<1x1x128xf32> to vector<8x16x128xf32>
    %27 = arith.mulf %24, %26 : vector<8x16x128xf32>
    %cst_17 = arith.constant 0.000000e+00 : f32
    %28 = vector.broadcast %cst_17 : f32 to vector<8x16x128xf32>
    %29 = arith.maximumf %27, %28 : vector<8x16x128xf32>
    %30 = vector.broadcast %19 : vector<8x16x1xf32> to vector<8x16x128xf32>
    %31 = arith.mulf %29, %30 : vector<8x16x128xf32>
    %32 = vector.shape_cast %31 : vector<8x16x128xf32> to vector<128x128xf32>
    %33 = arith.truncf %32 : vector<128x128xf32> to vector<128x128xbf16>
    %c0_18 = arith.constant 0 : index
    %c0_19 = arith.constant 0 : index
    %34 = vector.load %arg8[%c0_18, %c0_19] : memref<128x128xbf16, #tpu.memory_space<vmem>>, vector<128x128xbf16>
    %cst_20 = arith.constant dense<0.000000e+00> : vector<128x128xf32>
    %35 = tpu.matmul %33, %34, %cst_20 {dimension_numbers = #tpu.dot_dimension_numbers<[1], [0], [0], [1], [0, 0, 1, 1], [], []>} : vector<128x128xbf16>, vector<128x128xbf16>, vector<128x128xf32> -> vector<128x128xf32>
    %36 = vector.shape_cast %35 : vector<128x128xf32> to vector<8x16x128xf32>
    %c0_21 = arith.constant 0 : index
    %c0_22 = arith.constant 0 : index
    %37 = vector.load %arg9[%c0_21, %c0_22] : memref<1x128xf32, #tpu.memory_space<vmem>>, vector<1x128xf32>
    %38 = vector.shape_cast %37 : vector<1x128xf32> to vector<1x1x128xf32>
    %39 = vector.broadcast %38 : vector<1x1x128xf32> to vector<8x16x128xf32>
    %40 = arith.addf %36, %39 : vector<8x16x128xf32>
    %cst_23 = arith.constant 0.000000e+00 : f32
    %41 = vector.broadcast %cst_23 : f32 to vector<8x16x128xf32>
    %42 = arith.maximumf %40, %41 : vector<8x16x128xf32>
    %43 = vector.broadcast %19 : vector<8x16x1xf32> to vector<8x16x128xf32>
    %44 = arith.mulf %42, %43 : vector<8x16x128xf32>
    %c0_24 = arith.constant 0 : index
    %c0_25 = arith.constant 0 : index
    %45 = vector.load %arg10[%c0_24, %c0_25] : memref<1x128xf32, #tpu.memory_space<vmem>>, vector<1x128xf32>
    %46 = vector.shape_cast %45 : vector<1x128xf32> to vector<1x1x128xf32>
    %47 = vector.broadcast %46 : vector<1x1x128xf32> to vector<8x16x128xf32>
    %48 = arith.mulf %44, %47 : vector<8x16x128xf32>
    %cst_26 = arith.constant dense<0.000000e+00> : vector<8x16xf32>
    %49 = vector.multi_reduction <add>, %48, %cst_26 [2] : vector<8x16x128xf32> to vector<8x16xf32>
    %c0_27 = arith.constant 0 : index
    %c0_28 = arith.constant 0 : index
    %50 = vector.load %arg11[%c0_27, %c0_28] : memref<1x1xf32, #tpu.memory_space<vmem>>, vector<1x1xf32>
    %51 = vector.broadcast %50 : vector<1x1xf32> to vector<8x16xf32>
    %52 = arith.addf %49, %51 : vector<8x16xf32>
    %53 = arith.negf %52 : vector<8x16xf32>
    %54 = math.exp %53 : vector<8x16xf32>
    %cst_29 = arith.constant 1.000000e+00 : f32
    %55 = vector.broadcast %cst_29 : f32 to vector<8x16xf32>
    %56 = arith.addf %55, %54 : vector<8x16xf32>
    %57 = arith.divf %55, %56 : vector<8x16xf32>
    %58 = arith.mulf %57, %8 : vector<8x16xf32>
    %c0_30 = arith.constant 0 : index
    %c0_31 = arith.constant 0 : index
    %c0_32 = arith.constant 0 : index
    %59 = vector.load %arg13[%c0_30, %c0_31, %c0_32] : memref<1x8x16xf32, #tpu.memory_space<vmem>>, vector<1x8x16xf32>
    %60 = vector.shape_cast %59 : vector<1x8x16xf32> to vector<8x16xf32>
    %61 = vector.shape_cast %58 : vector<8x16xf32> to vector<1x8x16xf32>
    tpu.vector_store %arg13[%c0_30, %c0_31, %c0_32], %61 {strides = array<i32>} : memref<1x8x16xf32, #tpu.memory_space<vmem>>, vector<1x8x16xf32>,
    %c0_33 = arith.constant 0 : index
    %c0_34 = arith.constant 0 : index
    %c0_35 = arith.constant 0 : index
    %62 = vector.load %arg12[%c0_33, %c0_34, %c0_35] : memref<1x8x16xf32, #tpu.memory_space<vmem>>, vector<1x8x16xf32>
    %63 = vector.shape_cast %62 : vector<1x8x16xf32> to vector<8x16xf32>
    %cst_36 = arith.constant 9.99999997E-7 : f32
    %cst_37 = arith.constant 0.999998986 : f32
    %64 = vector.broadcast %cst_36 : f32 to vector<8x16xf32>
    %65 = arith.maximumf %64, %58 : vector<8x16xf32>
    %66 = vector.broadcast %cst_37 : f32 to vector<8x16xf32>
    %67 = arith.minimumf %66, %65 : vector<8x16xf32>
    %68 = math.log %67 : vector<8x16xf32>
    %69 = arith.mulf %63, %68 : vector<8x16xf32>
    %cst_38 = arith.constant 1.000000e+00 : f32
    %70 = vector.broadcast %cst_38 : f32 to vector<8x16xf32>
    %71 = arith.subf %70, %63 : vector<8x16xf32>
    %cst_39 = arith.constant 1.000000e+00 : f32
    %72 = vector.broadcast %cst_39 : f32 to vector<8x16xf32>
    %73 = arith.subf %72, %67 : vector<8x16xf32>
    %74 = math.log %73 : vector<8x16xf32>
    %75 = arith.mulf %71, %74 : vector<8x16xf32>
    %76 = arith.addf %69, %75 : vector<8x16xf32>
    %cst_40 = arith.constant 0.000000e+00 : f32
    %77 = vector.broadcast %cst_40 : f32 to vector<8x16xf32>
    %78 = arith.subf %77, %76 : vector<8x16xf32>
    %c0_41 = arith.constant 0 : index
    %c0_42 = arith.constant 0 : index
    %c0_43 = arith.constant 0 : index
    %79 = vector.load %arg14[%c0_41, %c0_42, %c0_43] : memref<1x1x1xf32, #tpu.memory_space<vmem>>, vector<1x1x1xf32>
    %80 = arith.mulf %78, %8 : vector<8x16xf32>
    %81 = vector.shape_cast %80 : vector<8x16xf32> to vector<1x8x16xf32>
    %cst_44 = arith.constant dense<0.000000e+00> : vector<1xf32>
    %82 = vector.multi_reduction <add>, %81, %cst_44 [1, 2] : vector<1x8x16xf32> to vector<1xf32>
    %83 = vector.shape_cast %82 : vector<1xf32> to vector<1x1x1xf32>
    %84 = vector.extract %83[0, 0, 0] : f32 from vector<1x1x1xf32>
    %85 = vector.broadcast %84 : f32 to vector<1x1x1xf32>
    %86 = arith.addf %79, %85 : vector<1x1x1xf32>
    %c0_45 = arith.constant 0 : index
    %c0_46 = arith.constant 0 : index
    %c0_47 = arith.constant 0 : index
    %87 = vector.load %arg14[%c0_45, %c0_46, %c0_47] : memref<1x1x1xf32, #tpu.memory_space<vmem>>, vector<1x1x1xf32>
    tpu.vector_store %arg14[%c0_45, %c0_46, %c0_47], %86 {strides = array<i32>} : memref<1x1x1xf32, #tpu.memory_space<vmem>>, vector<1x1x1xf32>,
    %c0_48 = arith.constant 0 : index
    %c0_49 = arith.constant 0 : index
    %c0_50 = arith.constant 0 : index
    %88 = vector.load %arg15[%c0_48, %c0_49, %c0_50] : memref<1x1x1xf32, #tpu.memory_space<vmem>>, vector<1x1x1xf32>
    %89 = vector.shape_cast %8 : vector<8x16xf32> to vector<1x8x16xf32>
    %cst_51 = arith.constant dense<0.000000e+00> : vector<1xf32>
    %90 = vector.multi_reduction <add>, %89, %cst_51 [1, 2] : vector<1x8x16xf32> to vector<1xf32>
    %91 = vector.shape_cast %90 : vector<1xf32> to vector<1x1x1xf32>
    %92 = vector.extract %91[0, 0, 0] : f32 from vector<1x1x1xf32>
    %93 = vector.broadcast %92 : f32 to vector<1x1x1xf32>
    %94 = arith.addf %88, %93 : vector<1x1x1xf32>
    %c0_52 = arith.constant 0 : index
    %c0_53 = arith.constant 0 : index
    %c0_54 = arith.constant 0 : index
    %95 = vector.load %arg15[%c0_52, %c0_53, %c0_54] : memref<1x1x1xf32, #tpu.memory_space<vmem>>, vector<1x1x1xf32>
    tpu.vector_store %arg15[%c0_52, %c0_53, %c0_54], %94 {strides = array<i32>} : memref<1x1x1xf32, #tpu.memory_space<vmem>>, vector<1x1x1xf32>,
    return
  }
  func.func @transform_0(%arg0: i32, %arg1: i32) -> (i32, i32, i32) {
    %c0_i32 = arith.constant 0 : i32
    %c0_i32_0 = arith.constant 0 : i32
    return %arg0, %arg1, %c0_i32 : i32, i32, i32
  }
  func.func @transform_1(%arg0: i32, %arg1: i32) -> (i32, i32, i32) {
    %c0_i32 = arith.constant 0 : i32
    %c0_i32_0 = arith.constant 0 : i32
    %c0_i32_1 = arith.constant 0 : i32
    return %arg0, %c0_i32, %c0_i32_0 : i32, i32, i32
  }
  func.func @transform_2(%arg0: i32, %arg1: i32) -> (i32, i32, i32) {
    %c0_i32 = arith.constant 0 : i32
    %c0_i32_0 = arith.constant 0 : i32
    %c0_i32_1 = arith.constant 0 : i32
    return %arg1, %c0_i32, %c0_i32_0 : i32, i32, i32
  }
  func.func @transform_3(%arg0: i32, %arg1: i32) -> (i32, i32) {
    %c0_i32 = arith.constant 0 : i32
    %c0_i32_0 = arith.constant 0 : i32
    return %arg1, %c0_i32 : i32, i32
  }
  func.func @transform_4(%arg0: i32, %arg1: i32) -> (i32, i32, i32) {
    %c0_i32 = arith.constant 0 : i32
    %c0_i32_0 = arith.constant 0 : i32
    %c0_i32_1 = arith.constant 0 : i32
    return %arg0, %c0_i32, %c0_i32_0 : i32, i32, i32
  }
  func.func @transform_5(%arg0: i32, %arg1: i32) -> (i32, i32) {
    %c0_i32 = arith.constant 0 : i32
    %c0_i32_0 = arith.constant 0 : i32
    %c0_i32_1 = arith.constant 0 : i32
    return %c0_i32, %c0_i32_0 : i32, i32
  }
  func.func @transform_6(%arg0: i32, %arg1: i32) -> (i32, i32) {
    %c0_i32 = arith.constant 0 : i32
    %c0_i32_0 = arith.constant 0 : i32
    %c0_i32_1 = arith.constant 0 : i32
    return %c0_i32, %c0_i32_0 : i32, i32
  }
  func.func @transform_7(%arg0: i32, %arg1: i32) -> (i32, i32) {
    %c0_i32 = arith.constant 0 : i32
    %c0_i32_0 = arith.constant 0 : i32
    %c0_i32_1 = arith.constant 0 : i32
    return %c0_i32, %c0_i32_0 : i32, i32
  }
  func.func @transform_8(%arg0: i32, %arg1: i32) -> (i32, i32) {
    %c0_i32 = arith.constant 0 : i32
    %c0_i32_0 = arith.constant 0 : i32
    %c0_i32_1 = arith.constant 0 : i32
    return %c0_i32, %c0_i32_0 : i32, i32
  }
  func.func @transform_9(%arg0: i32, %arg1: i32) -> (i32, i32) {
    %c0_i32 = arith.constant 0 : i32
    %c0_i32_0 = arith.constant 0 : i32
    %c0_i32_1 = arith.constant 0 : i32
    return %c0_i32, %c0_i32_0 : i32, i32
  }
  func.func @transform_10(%arg0: i32, %arg1: i32) -> (i32, i32, i32) {
    %c0_i32 = arith.constant 0 : i32
    %c0_i32_0 = arith.constant 0 : i32
    return %arg0, %arg1, %c0_i32 : i32, i32, i32
  }
  func.func @transform_11(%arg0: i32, %arg1: i32) -> (i32, i32, i32) {
    %c0_i32 = arith.constant 0 : i32
    %c0_i32_0 = arith.constant 0 : i32
    return %arg0, %arg1, %c0_i32 : i32, i32, i32
  }
  func.func @transform_12(%arg0: i32, %arg1: i32) -> (i32, i32, i32) {
    %c0_i32 = arith.constant 0 : i32
    %c0_i32_0 = arith.constant 0 : i32
    %c0_i32_1 = arith.constant 0 : i32
    return %arg0, %c0_i32, %c0_i32_0 : i32, i32, i32
  }
  func.func @transform_13(%arg0: i32, %arg1: i32) -> (i32, i32, i32) {
    %c0_i32 = arith.constant 0 : i32
    %c0_i32_0 = arith.constant 0 : i32
    %c0_i32_1 = arith.constant 0 : i32
    return %arg0, %c0_i32, %c0_i32_0 : i32, i32, i32
  }
}

</mosaic_0001>

<llo_original>
// kernel: tan_forward.4
$region0: #{tan_forward.4}
  #allocation0 [shape = 'u32[]', space=smem, size = 0x4, offset = 0x4, fixed_abs, tag = 'smem constant byte address 0x4 - core index']
  #allocation1 [shape = 'u32[144,128]{1,0:T(1,128)}', space=vmem, size = 0x12000, scoped, tag = 'internal scratch']
  %s0 = inlined_call_operand.vmem [shape: bf16[32,16], index: 0, kind: input, shape index: {}]
  %s1 = inlined_call_operand.vmem [shape: bf16[16,128], index: 1, kind: input, shape index: {}]
  %s2 = inlined_call_operand.vmem [shape: f32[1,128], index: 2, kind: input, shape index: {}]
  %s3 = inlined_call_operand.vmem [shape: f32[32,128], index: 3, kind: output, shape index: {}]
  %s4 = sld [smem:[#allocation0]]
  $region22: #{tan_forward.4} parent=0
    _
  %s6 = ssub.s32 1, %s4
  %s7 = scalar_select 0, %s6, %s4
  // Predicated region
  $region2: #{tan_forward.4} parent=0 // pred_check
    _
  $region3: #{tan_forward.4} parent=0 // pred_check_branch
    %9 = sbr.rel (0) target = $region5
  $region4: #{tan_forward.4} parent=0 // pred_region
    _
  $region5: #{tan_forward.4} parent=0 // pred_fallthru
    _
  // Predicated region
  $region6: #{tan_forward.4} parent=0 // pred_check
    _
  $region7: #{tan_forward.4} parent=0 // pred_check_branch
    %11 = sbr.rel (0) target = $region9
  $region8: #{tan_forward.4} parent=0 // pred_region
    _
  $region9: #{tan_forward.4} parent=0 // pred_fallthru
    _
  // Predicated region
  $region10: #{tan_forward.4} parent=0 // pred_check
    _
  $region11: #{tan_forward.4} parent=0 // pred_check_branch
    %13 = sbr.rel (0) target = $region13
  $region12: #{tan_forward.4} parent=0 // pred_region
    _
  $region13: #{tan_forward.4} parent=0 // pred_fallthru
    _
  %v15 = vld [vmem:[%s0] sm:$0xf]
  %v16 = vld [vmem:[%s0 + $0x4] sm:$0xf]
  %v17 = vld [vmem:[%s0 + $0x8] sm:$0xf]
  %v18 = vld [vmem:[%s0 + $0xc] sm:$0xf]
  %v19 = vld [vmem:[%s1] sm:$0xf]
  %v20 = vld [vmem:[%s1 + $0x4] sm:$0xf]
  %v21 = vld [vmem:[%s2] sm:$0x1]
  %v23 = vlaneseq
  %v24 = vshrl.u32 %v23, 7
  %v25 = vsub.s32 0, %v24
  %v26 = vrot.slane %v21, %v25
  %v32 = vunpack.c.l.b16 %v15
  %v33 = vunpack.c.l.b16 %v16
  %v34 = vunpack.c.l.b16 %v17
  %v35 = vunpack.c.l.b16 %v18
  %v36 = vpack.c.b16 %v33, %v32
  %v37 = vpack.c.b16 %v35, %v34
  %v40 = vunpack.c.l.b16 %v19
  %v41 = vunpack.c.l.b16 %v20
  %v42 = vpack.c.b16 %v41, %v40
  %vm44 = vcmask 130048
  %v46 = vsel %vm44, %v36, 0
  %v49 = vsel %vm44, %v37, 0
  %51 = vmatprep.subr.bf16.mxu0 0
  %52 = vmatpush1.bf16.msra.mxu0 %v42
  %53 = vmatprep.subr.bf16.mxu0 0
  %54 = vmatpush1.bf16.msra.mxu0 0
  %55 = vmatprep.subr.bf16.mxu0 0
  %56 = vmatpush1.bf16.msra.mxu0 0
  %57 = vmatprep.subr.bf16.mxu0 0
  %58 = vmatpush1.bf16.msra.mxu0 0
  %59 = vmatprep.subr.bf16.mxu0 0
  %60 = vmatpush1.bf16.msra.mxu0 0
  %61 = vmatprep.subr.bf16.mxu0 0
  %62 = vmatpush1.bf16.msra.mxu0 0
  %63 = vmatprep.subr.bf16.mxu0 0
  %64 = vmatpush1.bf16.msra.mxu0 0
  %65 = vmatprep.subr.bf16.mxu0 0
  %66 = vmatpush1.bf16.msra.mxu0 0
  %67 = vmatprep.subr.bf16.mxu0 0
  %68 = vmatpush1.bf16.msra.mxu0 0
  %69 = vmatprep.subr.bf16.mxu0 0
  %70 = vmatpush1.bf16.msra.mxu0 0
  %71 = vmatprep.subr.bf16.mxu0 0
  %72 = vmatpush1.bf16.msra.mxu0 0
  %73 = vmatprep.subr.bf16.mxu0 0
  %74 = vmatpush1.bf16.msra.mxu0 0
  %75 = vmatprep.subr.bf16.mxu0 0
  %76 = vmatpush1.bf16.msra.mxu0 0
  %77 = vmatprep.subr.bf16.mxu0 0
  %78 = vmatpush1.bf16.msra.mxu0 0
  %79 = vmatprep.subr.bf16.mxu0 0
  %80 = vmatpush1.bf16.msra.mxu0 0
  %81 = vmatprep.subr.bf16.mxu0 0
  %82 = vmatpush1.bf16.msra.mxu0 0
  %83 = vmatprep.mubr.bf16.mxu0 0
  %84 = vmatmul.mubr.bf16.gmra.mrb[0].mxu0 %v46
  %v85 = vpop.f32.mrb[0].mxu0
  %v86 = vadd.f32 %v26, %v85
  %v87 = vpop.f32.mrb[0].mxu0
  %v88 = vpop.f32.mrb[0].mxu0
  %v89 = vadd.f32 %v26, %v88
  %v90 = vpop.f32.mrb[0].mxu0
  %91 = vmatprep.mubr.bf16.mxu0 0
  %92 = vmatmul.mubr.bf16.gmra.mrb[0].mxu0 %v49
  %v93 = vpop.f32.mrb[0].mxu0
  %v94 = vadd.f32 %v26, %v93
  %v95 = vpop.f32.mrb[0].mxu0
  %v96 = vpop.f32.mrb[0].mxu0
  %v97 = vadd.f32 %v26, %v96
  %v98 = vpop.f32.mrb[0].mxu0
  %99 = vdwg.mxu0
  %v100 = vmax.f32 %v86, 0.0
  %v101 = vmax.f32 %v89, 0.0
  %v102 = vmax.f32 %v94, 0.0
  %v103 = vmax.f32 %v97, 0.0
  %104 = vst [vmem:[%s3] sm:$0xff] %v100
  %105 = vst [vmem:[%s3 + $0x8] sm:$0xff] %v101
  %106 = vst [vmem:[%s3 + $0x10] sm:$0xff] %v102
  %107 = vst [vmem:[%s3 + $0x18] sm:$0xff] %v103
  // Predicated region
  $region14: #{tan_forward.4} parent=0 // pred_check
    _
  $region15: #{tan_forward.4} parent=0 // pred_check_branch
    %109 = sbr.rel (0) target = $region17
  $region16: #{tan_forward.4} parent=0 // pred_region
    _
  $region17: #{tan_forward.4} parent=0 // pred_fallthru
    _
  // Predicated region
  $region18: #{tan_forward.4} parent=0 // pred_check
    _
  $region19: #{tan_forward.4} parent=0 // pred_check_branch
    %111 = sbr.rel (0) target = $region21
  $region20: #{tan_forward.4} parent=0 // pred_region
    _
  $region21: #{tan_forward.4} parent=0 // pred_fallthru
    _

// kernel: tan_forward.3
$region0: #{tan_forward.3}
  #allocation0 [shape = 'u32[]', space=smem, size = 0x4, offset = 0x4, fixed_abs, tag = 'smem constant byte address 0x4 - core index']
  #allocation1 [shape = 'u32[144,128]{1,0:T(1,128)}', space=vmem, size = 0x12000, scoped, tag = 'internal scratch']
  %s0 = inlined_call_operand.vmem [shape: bf16[16,64], index: 0, kind: input, shape index: {}]
  %s1 = inlined_call_operand.vmem [shape: bf16[64,64], index: 1, kind: input, shape index: {}]
  %s2 = inlined_call_operand.vmem [shape: f32[1,64], index: 2, kind: input, shape index: {}]
  %s3 = inlined_call_operand.vmem [shape: f32[16,64], index: 3, kind: output, shape index: {}]
  %s4 = sld [smem:[#allocation0]]
  $region22: #{tan_forward.3} parent=0
    _
  %s6 = ssub.s32 1, %s4
  %s7 = scalar_select 0, %s6, %s4
  // Predicated region
  $region2: #{tan_forward.3} parent=0 // pred_check
    _
  $region3: #{tan_forward.3} parent=0 // pred_check_branch
    %9 = sbr.rel (0) target = $region5
  $region4: #{tan_forward.3} parent=0 // pred_region
    _
  $region5: #{tan_forward.3} parent=0 // pred_fallthru
    _
  // Predicated region
  $region6: #{tan_forward.3} parent=0 // pred_check
    _
  $region7: #{tan_forward.3} parent=0 // pred_check_branch
    %11 = sbr.rel (0) target = $region9
  $region8: #{tan_forward.3} parent=0 // pred_region
    _
  $region9: #{tan_forward.3} parent=0 // pred_fallthru
    _
  // Predicated region
  $region10: #{tan_forward.3} parent=0 // pred_check
    _
  $region11: #{tan_forward.3} parent=0 // pred_check_branch
    %13 = sbr.rel (0) target = $region13
  $region12: #{tan_forward.3} parent=0 // pred_region
    _
  $region13: #{tan_forward.3} parent=0 // pred_fallthru
    _
  %v15 = vld [vmem:[%s0] sm:$0xf]
  %v16 = vld [vmem:[%s0 + $0x4] sm:$0xf]
  %v17 = vld [vmem:[%s1] sm:$0xf]
  %v18 = vld [vmem:[%s1 + $0x4] sm:$0xf]
  %v19 = vld [vmem:[%s1 + $0x8] sm:$0xf]
  %v20 = vld [vmem:[%s1 + $0xc] sm:$0xf]
  %v21 = vld [vmem:[%s1 + $0x10] sm:$0xf]
  %v22 = vld [vmem:[%s1 + $0x14] sm:$0xf]
  %v23 = vld [vmem:[%s1 + $0x18] sm:$0xf]
  %v24 = vld [vmem:[%s1 + $0x1c] sm:$0xf]
  %v25 = vld [vmem:[%s2] sm:$0x1]
  %v27 = vlaneseq
  %v28 = vshrl.u32 %v27, 7
  %v29 = vsub.s32 0, %v28
  %v30 = vrot.slane %v25, %v29
  %v34 = vunpack.c.l.b16 %v15
  %v35 = vunpack.c.l.b16 %v16
  %v36 = vpack.c.b16 %v35, %v34
  %v45 = vunpack.c.l.b16 %v17
  %v46 = vunpack.c.l.b16 %v18
  %v47 = vunpack.c.l.b16 %v19
  %v48 = vunpack.c.l.b16 %v20
  %v49 = vunpack.c.l.b16 %v21
  %v50 = vunpack.c.l.b16 %v22
  %v51 = vunpack.c.l.b16 %v23
  %v52 = vunpack.c.l.b16 %v24
  %v53 = vpack.c.b16 %v46, %v45
  %v54 = vpack.c.b16 %v48, %v47
  %v55 = vpack.c.b16 %v50, %v49
  %v56 = vpack.c.b16 %v52, %v51
  %vm61 = vcmask 523264
  %v63 = vsel %vm61, %v36, 0
  %65 = vmatprep.subr.bf16.mxu0 0
  %66 = vmatpush1.bf16.msra.mxu0 %v53
  %67 = vmatprep.subr.bf16.mxu0 0
  %68 = vmatpush1.bf16.msra.mxu0 %v54
  %69 = vmatprep.subr.bf16.mxu0 0
  %70 = vmatpush1.bf16.msra.mxu0 %v55
  %71 = vmatprep.subr.bf16.mxu0 0
  %72 = vmatpush1.bf16.msra.mxu0 %v56
  %73 = vmatprep.subr.bf16.mxu0 0
  %74 = vmatpush1.bf16.msra.mxu0 0
  %75 = vmatprep.subr.bf16.mxu0 0
  %76 = vmatpush1.bf16.msra.mxu0 0
  %77 = vmatprep.subr.bf16.mxu0 0
  %78 = vmatpush1.bf16.msra.mxu0 0
  %79 = vmatprep.subr.bf16.mxu0 0
  %80 = vmatpush1.bf16.msra.mxu0 0
  %81 = vmatprep.subr.bf16.mxu0 0
  %82 = vmatpush1.bf16.msra.mxu0 0
  %83 = vmatprep.subr.bf16.mxu0 0
  %84 = vmatpush1.bf16.msra.mxu0 0
  %85 = vmatprep.subr.bf16.mxu0 0
  %86 = vmatpush1.bf16.msra.mxu0 0
  %87 = vmatprep.subr.bf16.mxu0 0
  %88 = vmatpush1.bf16.msra.mxu0 0
  %89 = vmatprep.subr.bf16.mxu0 0
  %90 = vmatpush1.bf16.msra.mxu0 0
  %91 = vmatprep.subr.bf16.mxu0 0
  %92 = vmatpush1.bf16.msra.mxu0 0
  %93 = vmatprep.subr.bf16.mxu0 0
  %94 = vmatpush1.bf16.msra.mxu0 0
  %95 = vmatprep.subr.bf16.mxu0 0
  %96 = vmatpush1.bf16.msra.mxu0 0
  %97 = vmatprep.mubr.bf16.mxu0 0
  %98 = vmatmul.mubr.bf16.gmra.mrb[0].mxu0 %v63
  %v99 = vpop.f32.mrb[0].mxu0
  %v100 = vadd.f32 %v30, %v99
  %v101 = vpop.f32.mrb[0].mxu0
  %v102 = vpop.f32.mrb[0].mxu0
  %v103 = vadd.f32 %v30, %v102
  %v104 = vpop.f32.mrb[0].mxu0
  %105 = vdwg.mxu0
  %v106 = vmax.f32 %v100, 0.0
  %v107 = vmax.f32 %v103, 0.0
  %108 = vst.msk [vmem:[%s3] sm:$0xff] %vm61, %v106
  %109 = vst.msk [vmem:[%s3 + $0x8] sm:$0xff] %vm61, %v107
  // Predicated region
  $region14: #{tan_forward.3} parent=0 // pred_check
    _
  $region15: #{tan_forward.3} parent=0 // pred_check_branch
    %111 = sbr.rel (0) target = $region17
  $region16: #{tan_forward.3} parent=0 // pred_region
    _
  $region17: #{tan_forward.3} parent=0 // pred_fallthru
    _
  // Predicated region
  $region18: #{tan_forward.3} parent=0 // pred_check
    _
  $region19: #{tan_forward.3} parent=0 // pred_check_branch
    %113 = sbr.rel (0) target = $region21
  $region20: #{tan_forward.3} parent=0 // pred_region
    _
  $region21: #{tan_forward.3} parent=0 // pred_fallthru
    _

// kernel: tan_forward.5
$region0: #{tan_forward.5}
  #allocation0 [shape = 'u32[]', space=smem, size = 0x4, offset = 0x4, fixed_abs, tag = 'smem constant byte address 0x4 - core index']
  #allocation1 [shape = 'u32[144,128]{1,0:T(1,128)}', space=vmem, size = 0x12000, scoped, tag = 'internal scratch']
  #allocation2 [shape = 'f32[1,1]{1,0:T(1,128)S(1)}', space=vmem, size = 0x200, scoped, tag = 'scoped memory for tan_forward.5']
  %s0 = inlined_call_operand.vmem [shape: f32[2,16,128], index: 0, kind: input, shape index: {}]
  %s1 = inlined_call_operand.vmem [shape: f32[2,16,128], index: 1, kind: input, shape index: {}]
  %s2 = inlined_call_operand.vmem [shape: f32[16,16,1], index: 2, kind: input, shape index: {}]
  %s3 = inlined_call_operand.vmem [shape: f32[16,16], index: 3, kind: input, shape index: {}]
  %s4 = inlined_call_operand.vmem [shape: f32[2,1,128], index: 4, kind: input, shape index: {}]
  %s5 = inlined_call_operand.vmem [shape: bf16[128,128], index: 5, kind: input, shape index: {}]
  %s6 = inlined_call_operand.vmem [shape: bf16[128,128], index: 6, kind: input, shape index: {}]
  %s7 = inlined_call_operand.vmem [shape: f32[1,128], index: 7, kind: input, shape index: {}]
  %s8 = inlined_call_operand.vmem [shape: f32[1,128], index: 8, kind: input, shape index: {}]
  %s9 = inlined_call_operand.<no memory space> [shape: f32[1,1], index: 9, kind: input, shape index: {}]
  %s10 = inlined_call_operand.vmem [shape: f32[2,16,16], index: 10, kind: input, shape index: {}]
  %s11 = inlined_call_operand.hbm [shape: f32[2,16,16], index: 11, kind: output, shape index: {0}]
  %s12 = inlined_call_operand.vmem [shape: f32[2,1,1], index: 12, kind: output, shape index: {1}]
  %s13 = inlined_call_operand.vmem [shape: f32[2,1,1], index: 13, kind: output, shape index: {2}]
  %14 = xla_tuple %s11, %s12, %s13
  %s15 = sld [smem:[#allocation0]]
  $region97: #{tan_forward.5} parent=0
    _
  %s17 = ssub.s32 1, %s15
  %s18 = scalar_select 0, %s17, %s15
  %v19 = vstv %s9
  %20 = vst [vmem:[#allocation2] sm:$0x1] %v19
  $region1: #{tan_forward.5} parent=0
    #allocation3 [shape = 'u8[8192]{0}', space=vmem, size = 0x2000, scoped, tag = 'output window, operand 0']
    #allocation4 [shape = 's32[2]{0}', space=sflag, size = 0x8, scoped, tag = 'scoped memory for tan_forward.5']
    %21 = vsyncpa [#allocation4], 0
    %s22 = scalar_lea.sflag [#allocation4], 1
    %23 = vsyncpa %s22, 0
    loop: start=0, step=1, limit=6
    $region2: #{tan_forward.5} parent=1 // loop_pre_header
      _
    $region3: #{tan_forward.5} parent=1 // loop_header
      %s25 = sphi 0, %s29
      %p26 = scmp.ge.s32.totalorder %s25, 6
      %s32 = sphi 0, %s44
      %s33 = sphi 0, %s40
      %s34 = sphi 0, %s32
      %s35 = sphi 0, %s33
      %s36 = sphi 0, %s34
      %s37 = sphi 0, %s35
      %s49 = sphi 0, %s51
      %s52 = sphi 0, %s49
      %s53 = sphi 0, %s52
      %s69 = sphi 0, %s53
      %s75 = sphi 0, %s77
      %s78 = sphi 0, %s75
      %s79 = sphi 0, %s78
      %s95 = sphi 0, %s79
      %s101 = sphi 0, %s103
      %s104 = sphi 0, %s101
      %s105 = sphi 0, %s104
      %s121 = sphi 0, %s105
      %s127 = sphi 0, %s129
      %s130 = sphi 0, %s127
      %s131 = sphi 0, %s130
      %s147 = sphi 0, %s131
      %s153 = sphi 0, %s155
      %s156 = sphi 0, %s153
      %s157 = sphi 0, %s156
      %s173 = sphi 0, %s157
      %s177 = sphi 0, %s177
      %s179 = sphi 0, %s177
      %s180 = sphi 0, %s179
      %s194 = sphi 0, %s180
      %s198 = sphi 0, %s198
      %s200 = sphi 0, %s198
      %s201 = sphi 0, %s200
      %s215 = sphi 0, %s201
      %s219 = sphi 0, %s219
      %s221 = sphi 0, %s219
      %s222 = sphi 0, %s221
      %s236 = sphi 0, %s222
      %s240 = sphi 0, %s240
      %s242 = sphi 0, %s240
      %s243 = sphi 0, %s242
      %s257 = sphi 0, %s243
      %s261 = sphi 0, %s261
      %s263 = sphi 0, %s261
      %s264 = sphi 0, %s263
      %s278 = sphi 0, %s264
      %s286 = sphi 0, %s288
      %s289 = sphi 0, %s286
      %s290 = sphi 0, %s289
      %s306 = sphi 0, %s290
      %s314 = sphi 0, %s316
      %s317 = sphi 0, %s314
      %s318 = sphi 0, %s317
      %s334 = sphi 0, %s318
      %s340 = sphi 0, %s342
      %s343 = sphi 0, %s340
      %s344 = sphi 0, %s343
      %s360 = sphi 0, %s344
      %s366 = sphi 0, %s368
      %s369 = sphi 0, %s366
      %s370 = sphi 0, %s369
      %s386 = sphi 0, %s370
    $region4: #{tan_forward.5} parent=1 // loop_header_branch
      %28 = sbr.rel (%p26) target = $region8
    $region5: #{tan_forward.5} parent=1 // loop_body
      %s30 = ssub.s32 %s25, 1
      %s31 = ssub.s32 %s25, 2
      %s38 = sadd.s32 1, %s33
      %p39 = scmp.ge.s32.totalorder %s38, 2
      %s40 = scalar_select %p39, 0, %s38
      %s41 = sadd.s32 1, %s32
      %s42 = scalar_select %p39, %s41, %s32
      %p43 = scmp.ge.s32.totalorder %s42, 2
      %s44 = scalar_select %p43, 0, %s42
      %s45 = ssub.s32 %s32, %s44
      %s46 = ssub.s32 %s33, %s40
      %s47 = sor.u32 %s45, %s46
      %p48 = scmp.eq.s32.totalorder %s47, 0
      %s50 = sadd.s32 %s49, 1
      %s51 = scalar_select %p48, %s49, %s50
      %p54 = pneg %p48
      %p55 = scmp.eq.s32.totalorder %s25, 3
      %p56 = por %p54, %p55
      %p57 = scmp.ne.s32.totalorder %s49, %s52
      %p58 = scmp.eq.s32.totalorder %s25, 0
      %p59 = por %p57, %p58
      %p60 = scmp.ne.s32.totalorder %s49, %s52
      %p61 = scmp.eq.s32.totalorder %s30, 3
      %p62 = por %p60, %p61
      %p63 = scmp.ne.s32.totalorder %s52, %s53
      %p64 = scmp.eq.s32.totalorder %s30, 0
      %p65 = por %p63, %p64
      %p66 = scmp.ne.s32.totalorder %s52, %s53
      %p67 = scmp.eq.s32.totalorder %s31, 3
      %p68 = por %p66, %p67
      %p70 = scmp.ne.s32.totalorder %s53, %s69
      %p71 = scmp.eq.s32.totalorder %s31, 0
      %p72 = por %p70, %p71
      %s73 = ssub.s32 %s32, %s44
      %p74 = scmp.eq.s32.totalorder %s73, 0
      %s76 = sadd.s32 %s75, 1
      %s77 = scalar_select %p74, %s75, %s76
      %p80 = pneg %p74
      %p81 = scmp.eq.s32.totalorder %s25, 3
      %p82 = por %p80, %p81
      %p83 = scmp.ne.s32.totalorder %s75, %s78
      %p84 = scmp.eq.s32.totalorder %s25, 0
      %p85 = por %p83, %p84
      %p86 = scmp.ne.s32.totalorder %s75, %s78
      %p87 = scmp.eq.s32.totalorder %s30, 3
      %p88 = por %p86, %p87
      %p89 = scmp.ne.s32.totalorder %s78, %s79
      %p90 = scmp.eq.s32.totalorder %s30, 0
      %p91 = por %p89, %p90
      %p92 = scmp.ne.s32.totalorder %s78, %s79
      %p93 = scmp.eq.s32.totalorder %s31, 3
      %p94 = por %p92, %p93
      %p96 = scmp.ne.s32.totalorder %s79, %s95
      %p97 = scmp.eq.s32.totalorder %s31, 0
      %p98 = por %p96, %p97
      %s99 = ssub.s32 %s33, %s40
      %p100 = scmp.eq.s32.totalorder %s99, 0
      %s102 = sadd.s32 %s101, 1
      %s103 = scalar_select %p100, %s101, %s102
      %p106 = pneg %p100
      %p107 = scmp.eq.s32.totalorder %s25, 3
      %p108 = por %p106, %p107
      %p109 = scmp.ne.s32.totalorder %s101, %s104
      %p110 = scmp.eq.s32.totalorder %s25, 0
      %p111 = por %p109, %p110
      %p112 = scmp.ne.s32.totalorder %s101, %s104
      %p113 = scmp.eq.s32.totalorder %s30, 3
      %p114 = por %p112, %p113
      %p115 = scmp.ne.s32.totalorder %s104, %s105
      %p116 = scmp.eq.s32.totalorder %s30, 0
      %p117 = por %p115, %p116
      %p118 = scmp.ne.s32.totalorder %s104, %s105
      %p119 = scmp.eq.s32.totalorder %s31, 3
      %p120 = por %p118, %p119
      %p122 = scmp.ne.s32.totalorder %s105, %s121
      %p123 = scmp.eq.s32.totalorder %s31, 0
      %p124 = por %p122, %p123
      %s125 = ssub.s32 %s33, %s40
      %p126 = scmp.eq.s32.totalorder %s125, 0
      %s128 = sadd.s32 %s127, 1
      %s129 = scalar_select %p126, %s127, %s128
      %p132 = pneg %p126
      %p133 = scmp.eq.s32.totalorder %s25, 3
      %p134 = por %p132, %p133
      %p135 = scmp.ne.s32.totalorder %s127, %s130
      %p136 = scmp.eq.s32.totalorder %s25, 0
      %p137 = por %p135, %p136
      %p138 = scmp.ne.s32.totalorder %s127, %s130
      %p139 = scmp.eq.s32.totalorder %s30, 3
      %p140 = por %p138, %p139
      %p141 = scmp.ne.s32.totalorder %s130, %s131
      %p142 = scmp.eq.s32.totalorder %s30, 0
      %p143 = por %p141, %p142
      %p144 = scmp.ne.s32.totalorder %s130, %s131
      %p145 = scmp.eq.s32.totalorder %s31, 3
      %p146 = por %p144, %p145
      %p148 = scmp.ne.s32.totalorder %s131, %s147
      %p149 = scmp.eq.s32.totalorder %s31, 0
      %p150 = por %p148, %p149
      %s151 = ssub.s32 %s32, %s44
      %p152 = scmp.eq.s32.totalorder %s151, 0
      %s154 = sadd.s32 %s153, 1
      %s155 = scalar_select %p152, %s153, %s154
      %p158 = pneg %p152
      %p159 = scmp.eq.s32.totalorder %s25, 3
      %p160 = por %p158, %p159
      %p161 = scmp.ne.s32.totalorder %s153, %s156
      %p162 = scmp.eq.s32.totalorder %s25, 0
      %p163 = por %p161, %p162
      %p164 = scmp.ne.s32.totalorder %s153, %s156
      %p165 = scmp.eq.s32.totalorder %s30, 3
      %p166 = por %p164, %p165
      %p167 = scmp.ne.s32.totalorder %s156, %s157
      %p168 = scmp.eq.s32.totalorder %s30, 0
      %p169 = por %p167, %p168
      %p170 = scmp.ne.s32.totalorder %s156, %s157
      %p171 = scmp.eq.s32.totalorder %s31, 3
      %p172 = por %p170, %p171
      %p174 = scmp.ne.s32.totalorder %s157, %s173
      %p175 = scmp.eq.s32.totalorder %s31, 0
      %p176 = por %p174, %p175
      %s178 = sadd.s32 %s177, 1
      %p181 = scmp.eq.s32.totalorder %s25, 3
      %p182 = scmp.ne.s32.totalorder %s177, %s179
      %p183 = scmp.eq.s32.totalorder %s25, 0
      %p184 = por %p182, %p183
      %p185 = scmp.ne.s32.totalorder %s177, %s179
      %p186 = scmp.eq.s32.totalorder %s30, 3
      %p187 = por %p185, %p186
      %p188 = scmp.ne.s32.totalorder %s179, %s180
      %p189 = scmp.eq.s32.totalorder %s30, 0
      %p190 = por %p188, %p189
      %p191 = scmp.ne.s32.totalorder %s179, %s180
      %p192 = scmp.eq.s32.totalorder %s31, 3
      %p193 = por %p191, %p192
      %p195 = scmp.ne.s32.totalorder %s180, %s194
      %p196 = scmp.eq.s32.totalorder %s31, 0
      %p197 = por %p195, %p196
      %s199 = sadd.s32 %s198, 1
      %p202 = scmp.eq.s32.totalorder %s25, 3
      %p203 = scmp.ne.s32.totalorder %s198, %s200
      %p204 = scmp.eq.s32.totalorder %s25, 0
      %p205 = por %p203, %p204
      %p206 = scmp.ne.s32.totalorder %s198, %s200
      %p207 = scmp.eq.s32.totalorder %s30, 3
      %p208 = por %p206, %p207
      %p209 = scmp.ne.s32.totalorder %s200, %s201
      %p210 = scmp.eq.s32.totalorder %s30, 0
      %p211 = por %p209, %p210
      %p212 = scmp.ne.s32.totalorder %s200, %s201
      %p213 = scmp.eq.s32.totalorder %s31, 3
      %p214 = por %p212, %p213
      %p216 = scmp.ne.s32.totalorder %s201, %s215
      %p217 = scmp.eq.s32.totalorder %s31, 0
      %p218 = por %p216, %p217
      %s220 = sadd.s32 %s219, 1
      %p223 = scmp.eq.s32.totalorder %s25, 3
      %p224 = scmp.ne.s32.totalorder %s219, %s221
      %p225 = scmp.eq.s32.totalorder %s25, 0
      %p226 = por %p224, %p225
      %p227 = scmp.ne.s32.totalorder %s219, %s221
      %p228 = scmp.eq.s32.totalorder %s30, 3
      %p229 = por %p227, %p228
      %p230 = scmp.ne.s32.totalorder %s221, %s222
      %p231 = scmp.eq.s32.totalorder %s30, 0
      %p232 = por %p230, %p231
      %p233 = scmp.ne.s32.totalorder %s221, %s222
      %p234 = scmp.eq.s32.totalorder %s31, 3
      %p235 = por %p233, %p234
      %p237 = scmp.ne.s32.totalorder %s222, %s236
      %p238 = scmp.eq.s32.totalorder %s31, 0
      %p239 = por %p237, %p238
      %s241 = sadd.s32 %s240, 1
      %p244 = scmp.eq.s32.totalorder %s25, 3
      %p245 = scmp.ne.s32.totalorder %s240, %s242
      %p246 = scmp.eq.s32.totalorder %s25, 0
      %p247 = por %p245, %p246
      %p248 = scmp.ne.s32.totalorder %s240, %s242
      %p249 = scmp.eq.s32.totalorder %s30, 3
      %p250 = por %p248, %p249
      %p251 = scmp.ne.s32.totalorder %s242, %s243
      %p252 = scmp.eq.s32.totalorder %s30, 0
      %p253 = por %p251, %p252
      %p254 = scmp.ne.s32.totalorder %s242, %s243
      %p255 = scmp.eq.s32.totalorder %s31, 3
      %p256 = por %p254, %p255
      %p258 = scmp.ne.s32.totalorder %s243, %s257
      %p259 = scmp.eq.s32.totalorder %s31, 0
      %p260 = por %p258, %p259
      %s262 = sadd.s32 %s261, 1
      %p265 = scmp.eq.s32.totalorder %s25, 3
      %p266 = scmp.ne.s32.totalorder %s261, %s263
      %p267 = scmp.eq.s32.totalorder %s25, 0
      %p268 = por %p266, %p267
      %p269 = scmp.ne.s32.totalorder %s261, %s263
      %p270 = scmp.eq.s32.totalorder %s30, 3
      %p271 = por %p269, %p270
      %p272 = scmp.ne.s32.totalorder %s263, %s264
      %p273 = scmp.eq.s32.totalorder %s30, 0
      %p274 = por %p272, %p273
      %p275 = scmp.ne.s32.totalorder %s263, %s264
      %p276 = scmp.eq.s32.totalorder %s31, 3
      %p277 = por %p275, %p276
      %p279 = scmp.ne.s32.totalorder %s264, %s278
      %p280 = scmp.eq.s32.totalorder %s31, 0
      %p281 = por %p279, %p280
      %s282 = ssub.s32 %s32, %s44
      %s283 = ssub.s32 %s33, %s40
      %s284 = sor.u32 %s282, %s283
      %p285 = scmp.eq.s32.totalorder %s284, 0
      %s287 = sadd.s32 %s286, 1
      %s288 = scalar_select %p285, %s286, %s287
      %p291 = pneg %p285
      %p292 = scmp.eq.s32.totalorder %s25, 3
      %p293 = por %p291, %p292
      %p294 = scmp.ne.s32.totalorder %s286, %s289
      %p295 = scmp.eq.s32.totalorder %s25, 0
      %p296 = por %p294, %p295
      %p297 = scmp.ne.s32.totalorder %s286, %s289
      %p298 = scmp.eq.s32.totalorder %s30, 3
      %p299 = por %p297, %p298
      %p300 = scmp.ne.s32.totalorder %s289, %s290
      %p301 = scmp.eq.s32.totalorder %s30, 0
      %p302 = por %p300, %p301
      %p303 = scmp.ne.s32.totalorder %s289, %s290
      %p304 = scmp.eq.s32.totalorder %s31, 3
      %p305 = por %p303, %p304
      %p307 = scmp.ne.s32.totalorder %s290, %s306
      %p308 = scmp.eq.s32.totalorder %s31, 0
      %p309 = por %p307, %p308
      %s310 = ssub.s32 %s32, %s44
      %s311 = ssub.s32 %s33, %s40
      %s312 = sor.u32 %s310, %s311
      %p313 = scmp.eq.s32.totalorder %s312, 0
      %s315 = sadd.s32 %s314, 1
      %s316 = scalar_select %p313, %s314, %s315
      %p319 = pneg %p313
      %p320 = scmp.eq.s32.totalorder %s25, 3
      %p321 = por %p319, %p320
      %p322 = scmp.ne.s32.totalorder %s314, %s317
      %p323 = scmp.eq.s32.totalorder %s25, 0
      %p324 = por %p322, %p323
      %p325 = scmp.ne.s32.totalorder %s314, %s317
      %p326 = scmp.eq.s32.totalorder %s30, 3
      %p327 = por %p325, %p326
      %p328 = scmp.ne.s32.totalorder %s317, %s318
      %p329 = scmp.eq.s32.totalorder %s30, 0
      %p330 = por %p328, %p329
      %p331 = scmp.ne.s32.totalorder %s317, %s318
      %p332 = scmp.eq.s32.totalorder %s31, 3
      %p333 = por %p331, %p332
      %p335 = scmp.ne.s32.totalorder %s318, %s334
      %p336 = scmp.eq.s32.totalorder %s31, 0
      %p337 = por %p335, %p336
      %s338 = ssub.s32 %s32, %s44
      %p339 = scmp.eq.s32.totalorder %s338, 0
      %s341 = sadd.s32 %s340, 1
      %s342 = scalar_select %p339, %s340, %s341
      %p345 = pneg %p339
      %p346 = scmp.eq.s32.totalorder %s25, 3
      %p347 = por %p345, %p346
      %p348 = scmp.ne.s32.totalorder %s340, %s343
      %p349 = scmp.eq.s32.totalorder %s25, 0
      %p350 = por %p348, %p349
      %p351 = scmp.ne.s32.totalorder %s340, %s343
      %p352 = scmp.eq.s32.totalorder %s30, 3
      %p353 = por %p351, %p352
      %p354 = scmp.ne.s32.totalorder %s343, %s344
      %p355 = scmp.eq.s32.totalorder %s30, 0
      %p356 = por %p354, %p355
      %p357 = scmp.ne.s32.totalorder %s343, %s344
      %p358 = scmp.eq.s32.totalorder %s31, 3
      %p359 = por %p357, %p358
      %p361 = scmp.ne.s32.totalorder %s344, %s360
      %p362 = scmp.eq.s32.totalorder %s31, 0
      %p363 = por %p361, %p362
      %s364 = ssub.s32 %s32, %s44
      %p365 = scmp.eq.s32.totalorder %s364, 0
      %s367 = sadd.s32 %s366, 1
      %s368 = scalar_select %p365, %s366, %s367
      %p371 = pneg %p365
      %p372 = scmp.eq.s32.totalorder %s25, 3
      %p373 = por %p371, %p372
      %p374 = scmp.ne.s32.totalorder %s366, %s369
      %p375 = scmp.eq.s32.totalorder %s25, 0
      %p376 = por %p374, %p375
      %p377 = scmp.ne.s32.totalorder %s366, %s369
      %p378 = scmp.eq.s32.totalorder %s30, 3
      %p379 = por %p377, %p378
      %p380 = scmp.ne.s32.totalorder %s369, %s370
      %p381 = scmp.eq.s32.totalorder %s30, 0
      %p382 = por %p380, %p381
      %p383 = scmp.ne.s32.totalorder %s369, %s370
      %p384 = scmp.eq.s32.totalorder %s31, 3
      %p385 = por %p383, %p384
      %p387 = scmp.ne.s32.totalorder %s370, %s386
      %p388 = scmp.eq.s32.totalorder %s31, 0
      %p389 = por %p387, %p388
      %p390 = scmp.le.s32.totalorder 1, %s25
      %p391 = scmp.lt.s32.totalorder %s25, 5
      %p392 = pnand %p390, %p391
      %p393 = pneg %p392
      // Predicated region
      $region9: #{tan_forward.5} parent=5 // pred_check
        _
      $region10: #{tan_forward.5} parent=5 // pred_check_branch
        %395 = sbr.rel (%p392) target = $region12
      $region11: #{tan_forward.5} parent=5 // pred_region
        %s396 = ssub.s32 %s25, 1
        // Predicated region
        $region13: #{tan_forward.5} parent=11 // pred_check
          %p397 = pneg %p190
        $region14: #{tan_forward.5} parent=11 // pred_check_branch
          %399 = sbr.rel (%p397) target = $region16
        $region15: #{tan_forward.5} parent=11 // pred_region
          _
        $region16: #{tan_forward.5} parent=11 // pred_fallthru
          _
        // Predicated region
        $region17: #{tan_forward.5} parent=11 // pred_check
          %p400 = pneg %p211
        $region18: #{tan_forward.5} parent=11 // pred_check_branch
          %402 = sbr.rel (%p400) target = $region20
        $region19: #{tan_forward.5} parent=11 // pred_region
          _
        $region20: #{tan_forward.5} parent=11 // pred_fallthru
          _
        // Predicated region
        $region21: #{tan_forward.5} parent=11 // pred_check
          %p403 = pneg %p232
        $region22: #{tan_forward.5} parent=11 // pred_check_branch
          %405 = sbr.rel (%p403) target = $region24
        $region23: #{tan_forward.5} parent=11 // pred_region
          _
        $region24: #{tan_forward.5} parent=11 // pred_fallthru
          _
        // Predicated region
        $region25: #{tan_forward.5} parent=11 // pred_check
          %p406 = pneg %p253
        $region26: #{tan_forward.5} parent=11 // pred_check_branch
          %408 = sbr.rel (%p406) target = $region28
        $region27: #{tan_forward.5} parent=11 // pred_region
          _
        $region28: #{tan_forward.5} parent=11 // pred_fallthru
          _
        // Predicated region
        $region29: #{tan_forward.5} parent=11 // pred_check
          %p409 = pneg %p274
        $region30: #{tan_forward.5} parent=11 // pred_check_branch
          %411 = sbr.rel (%p409) target = $region32
        $region31: #{tan_forward.5} parent=11 // pred_region
          _
        $region32: #{tan_forward.5} parent=11 // pred_fallthru
          _
      $region12: #{tan_forward.5} parent=5 // pred_fallthru
        _
      %p412 = scmp.lt.s32.totalorder %s25, 4
      // Predicated region
      $region33: #{tan_forward.5} parent=5 // pred_check
        %p413 = pneg %p412
      $region34: #{tan_forward.5} parent=5 // pred_check_branch
        %415 = sbr.rel (%p413) target = $region36
      $region35: #{tan_forward.5} parent=5 // pred_region
        // Predicated region
        $region37: #{tan_forward.5} parent=35 // pred_check
          %p416 = pneg %p59
        $region38: #{tan_forward.5} parent=35 // pred_check_branch
          %418 = sbr.rel (%p416) target = $region40
        $region39: #{tan_forward.5} parent=35 // pred_region
          %p419 = scmp.lt.s32.totalorder %s32, 1
          %s420 = scalar_select %p419, %s32, 1
          %p421 = scmp.lt.s32.totalorder %s33, 1
          %s422 = scalar_select %p421, %s33, 1
          %s423 = smul.addr %s420, 2
          %s424 = sadd.s32 %s422, %s423
          %s425 = smul.addr %s424, 8
          %s426 = scalar_lea.vmem %s0, %s425
        $region40: #{tan_forward.5} parent=35 // pred_fallthru
          _
        // Predicated region
        $region41: #{tan_forward.5} parent=35 // pred_check
          %p427 = pneg %p85
        $region42: #{tan_forward.5} parent=35 // pred_check_branch
          %429 = sbr.rel (%p427) target = $region44
        $region43: #{tan_forward.5} parent=35 // pred_region
          %p430 = scmp.lt.s32.totalorder %s32, 1
          %s431 = scalar_select %p430, %s32, 1
          %s432 = smul.addr %s431, 2
          %s433 = smul.addr %s432, 8
          %s434 = scalar_lea.vmem %s1, %s433
        $region44: #{tan_forward.5} parent=35 // pred_fallthru
          _
        // Predicated region
        $region45: #{tan_forward.5} parent=35 // pred_check
          %p435 = pneg %p111
        $region46: #{tan_forward.5} parent=35 // pred_check_branch
          %437 = sbr.rel (%p435) target = $region48
        $region47: #{tan_forward.5} parent=35 // pred_region
          %s438 = smul.u32 8, %s33
          %p439 = scmp.lt.s32.totalorder %s438, 15
          %s440 = scalar_select %p439, %s438, 15
          %s441 = smul.addr %s440, 2
          %s442 = smul.addr %s441, 8
          %s443 = scalar_lea.vmem %s2, %s442
          %s444 = smul.u32 8, %s33
        $region48: #{tan_forward.5} parent=35 // pred_fallthru
          _
        // Predicated region
        $region49: #{tan_forward.5} parent=35 // pred_check
          %p445 = pneg %p137
        $region50: #{tan_forward.5} parent=35 // pred_check_branch
          %447 = sbr.rel (%p445) target = $region52
        $region51: #{tan_forward.5} parent=35 // pred_region
          %p448 = scmp.lt.s32.totalorder %s33, 1
          %s449 = scalar_select %p448, %s33, 1
          %s450 = smul.addr %s449, 8
          %s451 = scalar_lea.vmem %s3, %s450
        $region52: #{tan_forward.5} parent=35 // pred_fallthru
          _
        // Predicated region
        $region53: #{tan_forward.5} parent=35 // pred_check
          %p452 = pneg %p163
        $region54: #{tan_forward.5} parent=35 // pred_check_branch
          %454 = sbr.rel (%p452) target = $region56
        $region55: #{tan_forward.5} parent=35 // pred_region
          %p455 = scmp.lt.s32.totalorder %s32, 1
          %s456 = scalar_select %p455, %s32, 1
          %s457 = scalar_lea.vmem %s4, %s456
        $region56: #{tan_forward.5} parent=35 // pred_fallthru
          _
        // Predicated region
        $region57: #{tan_forward.5} parent=35 // pred_check
          %p458 = pneg %p296
        $region58: #{tan_forward.5} parent=35 // pred_check_branch
          %460 = sbr.rel (%p458) target = $region60
        $region59: #{tan_forward.5} parent=35 // pred_region
          %p461 = scmp.lt.s32.totalorder %s32, 1
          %s462 = scalar_select %p461, %s32, 1
          %p463 = scmp.lt.s32.totalorder %s33, 1
          %s464 = scalar_select %p463, %s33, 1
          %s465 = smul.addr %s462, 2
          %s466 = sadd.s32 %s464, %s465
          %s467 = smul.addr %s466, 8
          %s468 = scalar_lea.vmem %s10, %s467
        $region60: #{tan_forward.5} parent=35 // pred_fallthru
          _
      $region36: #{tan_forward.5} parent=5 // pred_fallthru
        _
      %p469 = scmp.le.s32.totalorder 1, %s25
      %p470 = scmp.lt.s32.totalorder %s25, 5
      %p471 = pnand %p469, %p470
      %p472 = pneg %p471
      // Predicated region
      $region61: #{tan_forward.5} parent=5 // pred_check
        _
      $region62: #{tan_forward.5} parent=5 // pred_check_branch
        %474 = sbr.rel (%p471) target = $region64
      $region63: #{tan_forward.5} parent=5 // pred_region
        %s475 = ssub.s32 %s25, 1
        %p476 = scmp.lt.s32.totalorder %s34, 1
        %s477 = scalar_select %p476, %s34, 1
        %p478 = scmp.lt.s32.totalorder %s35, 1
        %s479 = scalar_select %p478, %s35, 1
        %s480 = smul.addr %s477, 2
        %s481 = sadd.s32 %s479, %s480
        %s482 = smul.addr %s481, 8
        %s483 = scalar_lea.vmem %s0, %s482
        %p484 = pneg %p65
        %p485 = pneg %p62
        %p486 = scmp.lt.s32.totalorder %s34, 1
        %s487 = scalar_select %p486, %s34, 1
        %s488 = smul.addr %s487, 2
        %s489 = smul.addr %s488, 8
        %s490 = scalar_lea.vmem %s1, %s489
        %p491 = pneg %p91
        %p492 = pneg %p88
        %s493 = smul.u32 8, %s35
        %p494 = scmp.lt.s32.totalorder %s493, 15
        %s495 = scalar_select %p494, %s493, 15
        %s496 = smul.addr %s495, 2
        %s497 = smul.addr %s496, 8
        %s498 = scalar_lea.vmem %s2, %s497
        %p499 = pneg %p117
        %p500 = pneg %p114
        %p501 = scmp.lt.s32.totalorder %s35, 1
        %s502 = scalar_select %p501, %s35, 1
        %s503 = smul.addr %s502, 8
        %s504 = scalar_lea.vmem %s3, %s503
        %p505 = pneg %p143
        %p506 = pneg %p140
        %p507 = scmp.lt.s32.totalorder %s34, 1
        %s508 = scalar_select %p507, %s34, 1
        %s509 = scalar_lea.vmem %s4, %s508
        %p510 = pneg %p169
        %p511 = pneg %p166
        %p512 = pneg %p190
        %p513 = pneg %p187
        %p514 = pneg %p211
        %p515 = pneg %p208
        %p516 = pneg %p232
        %p517 = pneg %p229
        %p518 = pneg %p253
        %p519 = pneg %p250
        %p520 = pneg %p274
        %p521 = pneg %p271
        %p522 = scmp.lt.s32.totalorder %s34, 1
        %s523 = scalar_select %p522, %s34, 1
        %p524 = scmp.lt.s32.totalorder %s35, 1
        %s525 = scalar_select %p524, %s35, 1
        %s526 = smul.addr %s523, 2
        %s527 = sadd.s32 %s525, %s526
        %s528 = smul.addr %s527, 8
        %s529 = scalar_lea.vmem %s10, %s528
        %p530 = pneg %p302
        %p531 = pneg %p299
        %p532 = pneg %p330
        %p533 = pneg %p327
        %s534 = sand.u32 %s317, 1
        %s535 = scalar_lea.sflag [#allocation4], %s534
        %s536 = sand.u32 %s317, 1
        %s537 = smul.addr %s536, 8
        %s538 = scalar_lea.vmem [#allocation3], %s537
        %p539 = pneg %p356
        %p540 = pneg %p353
        %p541 = scmp.lt.s32.totalorder %s34, 1
        %s542 = scalar_select %p541, %s34, 1
        %s543 = scalar_lea.vmem %s12, %s542
        %p544 = pneg %p382
        %p545 = pneg %p379
        %p546 = scmp.lt.s32.totalorder %s34, 1
        %s547 = scalar_select %p546, %s34, 1
        %s548 = scalar_lea.vmem %s13, %s547
        %p549 = scmp.lt.s32.totalorder %s34, 1
        %s550 = scalar_select %p549, %s34, 1
        %p551 = scmp.lt.s32.totalorder %s35, 1
        %s552 = scalar_select %p551, %s35, 1
        %s553 = smul.addr %s550, 2
        %s554 = sadd.s32 %s552, %s553
        %s555 = smul.addr %s554, 8
        %s556 = scalar_lea.vmem %s0, %s555
        %p557 = scmp.lt.s32.totalorder %s34, 1
        %s558 = scalar_select %p557, %s34, 1
        %s559 = smul.addr %s558, 2
        %s560 = smul.addr %s559, 8
        %s561 = scalar_lea.vmem %s1, %s560
        %s562 = smul.u32 8, %s35
        %p563 = scmp.lt.s32.totalorder %s562, 15
        %s564 = scalar_select %p563, %s562, 15
        %s565 = smul.addr %s564, 2
        %s566 = smul.addr %s565, 8
        %s567 = scalar_lea.vmem %s2, %s566
        %s568 = smul.u32 8, %s35
        %p569 = scmp.lt.s32.totalorder %s35, 1
        %s570 = scalar_select %p569, %s35, 1
        %s571 = smul.addr %s570, 8
        %s572 = scalar_lea.vmem %s3, %s571
        %p573 = scmp.lt.s32.totalorder %s34, 1
        %s574 = scalar_select %p573, %s34, 1
        %s575 = scalar_lea.vmem %s4, %s574
        %p576 = scmp.lt.s32.totalorder %s34, 1
        %s577 = scalar_select %p576, %s34, 1
        %p578 = scmp.lt.s32.totalorder %s35, 1
        %s579 = scalar_select %p578, %s35, 1
        %s580 = smul.addr %s577, 2
        %s581 = sadd.s32 %s579, %s580
        %s582 = smul.addr %s581, 8
        %s583 = scalar_lea.vmem %s10, %s582
        %p584 = scmp.lt.s32.totalorder %s34, 1
        %s585 = scalar_select %p584, %s34, 1
        %s586 = scalar_lea.vmem %s12, %s585
        %p587 = scmp.lt.s32.totalorder %s34, 1
        %s588 = scalar_select %p587, %s34, 1
        %s589 = scalar_lea.vmem %s13, %s588
        %p591 = scmp.eq.s32.totalorder %s35, 0
        // Predicated region
        $region65: #{tan_forward.5} parent=63 // pred_check
          %p592 = pneg %p591
        $region66: #{tan_forward.5} parent=63 // pred_check_branch
          %594 = sbr.rel (%p592) target = $region68
        $region67: #{tan_forward.5} parent=63 // pred_region
          %vm595 = vcmask 0
          %596 = vst.msk [vmem:[%s586] sm:$0x1] %vm595, 0.0
          %597 = vst.msk [vmem:[%s589] sm:$0x1] %vm595, 0.0
        $region68: #{tan_forward.5} parent=63 // pred_fallthru
          _
        %v598 = vld [vmem:[%s556] sm:$0xff]
        %v599 = vld [vmem:[%s561] sm:$0xff]
        %v600 = vld [vmem:[%s561 + $0x8] sm:$0xff]
        %v601 = vld [vmem:[%s567] sm:$0xff]
        %v602 = vld [vmem:[%s567 + $0x8] sm:$0xff]
        %v603 = vld [vmem:[%s567 + $0x10] sm:$0xff]
        %v604 = vld [vmem:[%s567 + $0x18] sm:$0xff]
        %v605 = vld [vmem:[%s567 + $0x20] sm:$0xff]
        %v606 = vld [vmem:[%s567 + $0x28] sm:$0xff]
        %v607 = vld [vmem:[%s567 + $0x30] sm:$0xff]
        %v608 = vld [vmem:[%s567 + $0x38] sm:$0xff]
        %v609 = vld [vmem:[%s567 + $0x40] sm:$0xff]
        %v610 = vld [vmem:[%s567 + $0x48] sm:$0xff]
        %v611 = vld [vmem:[%s567 + $0x50] sm:$0xff]
        %v612 = vld [vmem:[%s567 + $0x58] sm:$0xff]
        %v613 = vld [vmem:[%s567 + $0x60] sm:$0xff]
        %v614 = vld [vmem:[%s567 + $0x68] sm:$0xff]
        %v615 = vld [vmem:[%s567 + $0x70] sm:$0xff]
        %v616 = vld [vmem:[%s567 + $0x78] sm:$0xff]
        %v617 = vld [vmem:[%s572] sm:$0xff]
        %v619 = vcombine.high %v598, %v598
        %v621 = vunpack.c.l.s4 1966171168
        %v622 = vunpack.c.0.s8 %v621
        %v623 = vlaneseq
        %v624 = vshrl.u32 %v623, 7
        %v625 = vsub.s32 %v622, %v624
        %v626 = vrot.slane %v598, %v625
        %v628 = vunpack.c.l.s4 1966171168
        %v629 = vunpack.c.0.s8 %v628
        %v630 = vlaneseq
        %v631 = vshrl.u32 %v630, 7
        %v632 = vsub.s32 %v629, %v631
        %v633 = vrot.slane %v619, %v632
        %v634 = vcombine.high %v626, %v626
        %v635 = vcombine.high %v633, %v633
        %v637 = vunpack.c.l.s4 1966171168
        %v638 = vunpack.c.0.s8 %v637
        %v639 = vlaneseq
        %v640 = vshrl.u32 %v639, 7
        %v641 = vsub.s32 %v638, %v640
        %v642 = vrot.slane %v626, %v641
        %v644 = vunpack.c.l.s4 1966171168
        %v645 = vunpack.c.0.s8 %v644
        %v646 = vlaneseq
        %v647 = vshrl.u32 %v646, 7
        %v648 = vsub.s32 %v645, %v647
        %v649 = vrot.slane %v633, %v648
        %v651 = vunpack.c.l.s4 1966171168
        %v652 = vunpack.c.0.s8 %v651
        %v653 = vlaneseq
        %v654 = vshrl.u32 %v653, 7
        %v655 = vsub.s32 %v652, %v654
        %v656 = vrot.slane %v634, %v655
        %v658 = vunpack.c.l.s4 1966171168
        %v659 = vunpack.c.0.s8 %v658
        %v660 = vlaneseq
        %v661 = vshrl.u32 %v660, 7
        %v662 = vsub.s32 %v659, %v661
        %v663 = vrot.slane %v635, %v662
        %v664 = vcombine.high %v642, %v642
        %v665 = vcombine.high %v649, %v649
        %v666 = vcombine.high %v656, %v656
        %v667 = vcombine.high %v663, %v663
        %v668 = vlaneseq
        %v669 = vshrl.u32 %v668, 7
        %v670 = vsub.s32 0, %v669
        %v671 = vrot.slane %v642, %v670
        %v672 = vlaneseq
        %v673 = vshrl.u32 %v672, 7
        %v674 = vsub.s32 0, %v673
        %v675 = vrot.slane %v656, %v674
        %v676 = vlaneseq
        %v677 = vshrl.u32 %v676, 7
        %v678 = vsub.s32 0, %v677
        %v679 = vrot.slane %v664, %v678
        %v680 = vlaneseq
        %v681 = vshrl.u32 %v680, 7
        %v682 = vsub.s32 0, %v681
        %v683 = vrot.slane %v666, %v682
        %v684 = vlaneseq
        %v685 = vshrl.u32 %v684, 7
        %v686 = vsub.s32 0, %v685
        %v687 = vrot.slane %v649, %v686
        %v688 = vlaneseq
        %v689 = vshrl.u32 %v688, 7
        %v690 = vsub.s32 0, %v689
        %v691 = vrot.slane %v663, %v690
        %v692 = vlaneseq
        %v693 = vshrl.u32 %v692, 7
        %v694 = vsub.s32 0, %v693
        %v695 = vrot.slane %v665, %v694
        %v696 = vlaneseq
        %v697 = vshrl.u32 %v696, 7
        %v698 = vsub.s32 0, %v697
        %v699 = vrot.slane %v667, %v698
        %v708 = vsub.f32 %v599, %v671
        %v709 = vsub.f32 %v600, %v671
        %v710 = vsub.f32 %v599, %v675
        %v711 = vsub.f32 %v600, %v675
        %v712 = vsub.f32 %v599, %v679
        %v713 = vsub.f32 %v600, %v679
        %v714 = vsub.f32 %v599, %v683
        %v715 = vsub.f32 %v600, %v683
        %v716 = vsub.f32 %v599, %v687
        %v717 = vsub.f32 %v600, %v687
        %v718 = vsub.f32 %v599, %v691
        %v719 = vsub.f32 %v600, %v691
        %v720 = vsub.f32 %v599, %v695
        %v721 = vsub.f32 %v600, %v695
        %v722 = vsub.f32 %v599, %v699
        %v723 = vsub.f32 %v600, %v699
        %725 = vset.pattern.permute.xlu0 0
        %726 = vperm.xlu0 %725, %v601
        %v727 = vpop.permute.xlu0 %726
        %730 = vset.pattern.permute.xlu0 0
        %731 = vperm.xlu0 %730, %v602
        %v732 = vpop.permute.xlu0 %731
        %735 = vset.pattern.permute.xlu0 0
        %736 = vperm.xlu0 %735, %v603
        %v737 = vpop.permute.xlu0 %736
        %740 = vset.pattern.permute.xlu0 0
        %741 = vperm.xlu0 %740, %v604
        %v742 = vpop.permute.xlu0 %741
        %745 = vset.pattern.permute.xlu0 0
        %746 = vperm.xlu0 %745, %v605
        %v747 = vpop.permute.xlu0 %746
        %750 = vset.pattern.permute.xlu0 0
        %751 = vperm.xlu0 %750, %v606
        %v752 = vpop.permute.xlu0 %751
        %755 = vset.pattern.permute.xlu0 0
        %756 = vperm.xlu0 %755, %v607
        %v757 = vpop.permute.xlu0 %756
        %760 = vset.pattern.permute.xlu0 0
        %761 = vperm.xlu0 %760, %v608
        %v762 = vpop.permute.xlu0 %761
        %765 = vset.pattern.permute.xlu0 0
        %766 = vperm.xlu0 %765, %v609
        %v767 = vpop.permute.xlu0 %766
        %770 = vset.pattern.permute.xlu0 0
        %771 = vperm.xlu0 %770, %v610
        %v772 = vpop.permute.xlu0 %771
        %775 = vset.pattern.permute.xlu0 0
        %776 = vperm.xlu0 %775, %v611
        %v777 = vpop.permute.xlu0 %776
        %780 = vset.pattern.permute.xlu0 0
        %781 = vperm.xlu0 %780, %v612
        %v782 = vpop.permute.xlu0 %781
        %785 = vset.pattern.permute.xlu0 0
        %786 = vperm.xlu0 %785, %v613
        %v787 = vpop.permute.xlu0 %786
        %790 = vset.pattern.permute.xlu0 0
        %791 = vperm.xlu0 %790, %v614
        %v792 = vpop.permute.xlu0 %791
        %795 = vset.pattern.permute.xlu0 0
        %796 = vperm.xlu0 %795, %v615
        %v797 = vpop.permute.xlu0 %796
        %800 = vset.pattern.permute.xlu0 0
        %801 = vperm.xlu0 %800, %v616
        %v802 = vpop.permute.xlu0 %801
        %v804 = vmul.f32 %v708, %v727
        %v805 = vmul.f32 %v709, %v732
        %v806 = vmul.f32 %v710, %v737
        %v807 = vmul.f32 %v711, %v742
        %v808 = vmul.f32 %v712, %v747
        %v809 = vmul.f32 %v713, %v752
        %v810 = vmul.f32 %v714, %v757
        %v811 = vmul.f32 %v715, %v762
        %v812 = vmul.f32 %v716, %v767
        %v813 = vmul.f32 %v717, %v772
        %v814 = vmul.f32 %v718, %v777
        %v815 = vmul.f32 %v719, %v782
        %v816 = vmul.f32 %v720, %v787
        %v817 = vmul.f32 %v721, %v792
        %v818 = vmul.f32 %v722, %v797
        %v819 = vmul.f32 %v723, %v802
        %vm820 = vcmp.gt.f32.partialorder %v601, 0.0
        %vm821 = vcmp.gt.f32.partialorder %v602, 0.0
        %vm822 = vcmp.gt.f32.partialorder %v603, 0.0
        %vm823 = vcmp.gt.f32.partialorder %v604, 0.0
        %vm824 = vcmp.gt.f32.partialorder %v605, 0.0
        %vm825 = vcmp.gt.f32.partialorder %v606, 0.0
        %vm826 = vcmp.gt.f32.partialorder %v607, 0.0
        %vm827 = vcmp.gt.f32.partialorder %v608, 0.0
        %vm828 = vcmp.gt.f32.partialorder %v609, 0.0
        %vm829 = vcmp.gt.f32.partialorder %v610, 0.0
        %vm830 = vcmp.gt.f32.partialorder %v611, 0.0
        %vm831 = vcmp.gt.f32.partialorder %v612, 0.0
        %vm832 = vcmp.gt.f32.partialorder %v613, 0.0
        %vm833 = vcmp.gt.f32.partialorder %v614, 0.0
        %vm834 = vcmp.gt.f32.partialorder %v615, 0.0
        %vm835 = vcmp.gt.f32.partialorder %v616, 0.0
        %v836 = vsel %vm820, 1, 0
        %v837 = vsel %vm821, 1, 0
        %v838 = vsel %vm822, 1, 0
        %v839 = vsel %vm823, 1, 0
        %v840 = vsel %vm824, 1, 0
        %v841 = vsel %vm825, 1, 0
        %v842 = vsel %vm826, 1, 0
        %v843 = vsel %vm827, 1, 0
        %v844 = vsel %vm828, 1, 0
        %v845 = vsel %vm829, 1, 0
        %v846 = vsel %vm830, 1, 0
        %v847 = vsel %vm831, 1, 0
        %v848 = vsel %vm832, 1, 0
        %v849 = vsel %vm833, 1, 0
        %v850 = vsel %vm834, 1, 0
        %v851 = vsel %vm835, 1, 0
        %v852 = vcvt.s32.f32 %v836
        %v853 = vcvt.s32.f32 %v837
        %v854 = vcvt.s32.f32 %v838
        %v855 = vcvt.s32.f32 %v839
        %v856 = vcvt.s32.f32 %v840
        %v857 = vcvt.s32.f32 %v841
        %v858 = vcvt.s32.f32 %v842
        %v859 = vcvt.s32.f32 %v843
        %v860 = vcvt.s32.f32 %v844
        %v861 = vcvt.s32.f32 %v845
        %v862 = vcvt.s32.f32 %v846
        %v863 = vcvt.s32.f32 %v847
        %v864 = vcvt.s32.f32 %v848
        %v865 = vcvt.s32.f32 %v849
        %v866 = vcvt.s32.f32 %v850
        %v867 = vcvt.s32.f32 %v851
        %v868 = vpack.c.bf16 %v805, %v804
        %v869 = vpack.c.bf16 %v807, %v806
        %v870 = vpack.c.bf16 %v809, %v808
        %v871 = vpack.c.bf16 %v811, %v810
        %v872 = vpack.c.bf16 %v813, %v812
        %v873 = vpack.c.bf16 %v815, %v814
        %v874 = vpack.c.bf16 %v817, %v816
        %v875 = vpack.c.bf16 %v819, %v818
        %v876 = vld [vmem:[%s5] sm:$0xf]
        %v877 = vld [vmem:[%s5 + $0x4] sm:$0xf]
        %v878 = vld [vmem:[%s5 + $0x8] sm:$0xf]
        %v879 = vld [vmem:[%s5 + $0xc] sm:$0xf]
        %v880 = vld [vmem:[%s5 + $0x10] sm:$0xf]
        %v881 = vld [vmem:[%s5 + $0x14] sm:$0xf]
        %v882 = vld [vmem:[%s5 + $0x18] sm:$0xf]
        %v883 = vld [vmem:[%s5 + $0x1c] sm:$0xf]
        %v884 = vld [vmem:[%s5 + $0x20] sm:$0xf]
        %v885 = vld [vmem:[%s5 + $0x24] sm:$0xf]
        %v886 = vld [vmem:[%s5 + $0x28] sm:$0xf]
        %v887 = vld [vmem:[%s5 + $0x2c] sm:$0xf]
        %v888 = vld [vmem:[%s5 + $0x30] sm:$0xf]
        %v889 = vld [vmem:[%s5 + $0x34] sm:$0xf]
        %v890 = vld [vmem:[%s5 + $0x38] sm:$0xf]
        %v891 = vld [vmem:[%s5 + $0x3c] sm:$0xf]
        %v908 = vunpack.c.l.b16 %v876
        %v909 = vunpack.c.l.b16 %v877
        %v910 = vunpack.c.l.b16 %v878
        %v911 = vunpack.c.l.b16 %v879
        %v912 = vunpack.c.l.b16 %v880
        %v913 = vunpack.c.l.b16 %v881
        %v914 = vunpack.c.l.b16 %v882
        %v915 = vunpack.c.l.b16 %v883
        %v916 = vunpack.c.l.b16 %v884
        %v917 = vunpack.c.l.b16 %v885
        %v918 = vunpack.c.l.b16 %v886
        %v919 = vunpack.c.l.b16 %v887
        %v920 = vunpack.c.l.b16 %v888
        %v921 = vunpack.c.l.b16 %v889
        %v922 = vunpack.c.l.b16 %v890
        %v923 = vunpack.c.l.b16 %v891
        %v924 = vpack.c.b16 %v909, %v908
        %v925 = vpack.c.b16 %v911, %v910
        %v926 = vpack.c.b16 %v913, %v912
        %v927 = vpack.c.b16 %v915, %v914
        %v928 = vpack.c.b16 %v917, %v916
        %v929 = vpack.c.b16 %v919, %v918
        %v930 = vpack.c.b16 %v921, %v920
        %v931 = vpack.c.b16 %v923, %v922
        %940 = vmatprep.subr.bf16.mxu0 0
        %941 = vmatpush1.bf16.msra.mxu0 %v924
        %942 = vmatprep.subr.bf16.mxu0 0
        %943 = vmatpush1.bf16.msra.mxu0 %v925
        %944 = vmatprep.subr.bf16.mxu0 0
        %945 = vmatpush1.bf16.msra.mxu0 %v926
        %946 = vmatprep.subr.bf16.mxu0 0
        %947 = vmatpush1.bf16.msra.mxu0 %v927
        %948 = vmatprep.subr.bf16.mxu0 0
        %949 = vmatpush1.bf16.msra.mxu0 %v928
        %950 = vmatprep.subr.bf16.mxu0 0
        %951 = vmatpush1.bf16.msra.mxu0 %v929
        %952 = vmatprep.subr.bf16.mxu0 0
        %953 = vmatpush1.bf16.msra.mxu0 %v930
        %954 = vmatprep.subr.bf16.mxu0 0
        %955 = vmatpush1.bf16.msra.mxu0 %v931
        %956 = vmatprep.subr.bf16.mxu0 0
        %957 = vmatpush1.bf16.msra.mxu0 0
        %958 = vmatprep.subr.bf16.mxu0 0
        %959 = vmatpush1.bf16.msra.mxu0 0
        %960 = vmatprep.subr.bf16.mxu0 0
        %961 = vmatpush1.bf16.msra.mxu0 0
        %962 = vmatprep.subr.bf16.mxu0 0
        %963 = vmatpush1.bf16.msra.mxu0 0
        %964 = vmatprep.subr.bf16.mxu0 0
        %965 = vmatpush1.bf16.msra.mxu0 0
        %966 = vmatprep.subr.bf16.mxu0 0
        %967 = vmatpush1.bf16.msra.mxu0 0
        %968 = vmatprep.subr.bf16.mxu0 0
        %969 = vmatpush1.bf16.msra.mxu0 0
        %970 = vmatprep.subr.bf16.mxu0 0
        %971 = vmatpush1.bf16.msra.mxu0 0
        %972 = vmatprep.mubr.bf16.mxu0 0
        %973 = vmatmul.mubr.bf16.gmra.mrb[0].mxu0 %v868
        %v974 = vpop.f32.mrb[0].mxu0
        %v975 = vadd.f32 0.0, %v974
        %v976 = vpop.f32.mrb[0].mxu0
        %v977 = vpop.f32.mrb[0].mxu0
        %v978 = vadd.f32 0.0, %v977
        %v979 = vpop.f32.mrb[0].mxu0
        %980 = vmatprep.mubr.bf16.mxu0 0
        %981 = vmatmul.mubr.bf16.gmra.mrb[0].mxu0 %v869
        %v982 = vpop.f32.mrb[0].mxu0
        %v983 = vadd.f32 0.0, %v982
        %v984 = vpop.f32.mrb[0].mxu0
        %v985 = vpop.f32.mrb[0].mxu0
        %v986 = vadd.f32 0.0, %v985
        %v987 = vpop.f32.mrb[0].mxu0
        %988 = vmatprep.mubr.bf16.mxu0 0
        %989 = vmatmul.mubr.bf16.gmra.mrb[0].mxu0 %v870
        %v990 = vpop.f32.mrb[0].mxu0
        %v991 = vadd.f32 0.0, %v990
        %v992 = vpop.f32.mrb[0].mxu0
        %v993 = vpop.f32.mrb[0].mxu0
        %v994 = vadd.f32 0.0, %v993
        %v995 = vpop.f32.mrb[0].mxu0
        %996 = vmatprep.mubr.bf16.mxu0 0
        %997 = vmatmul.mubr.bf16.gmra.mrb[0].mxu0 %v871
        %v998 = vpop.f32.mrb[0].mxu0
        %v999 = vadd.f32 0.0, %v998
        %v1000 = vpop.f32.mrb[0].mxu0
        %v1001 = vpop.f32.mrb[0].mxu0
        %v1002 = vadd.f32 0.0, %v1001
        %v1003 = vpop.f32.mrb[0].mxu0
        %1004 = vmatprep.mubr.bf16.mxu0 0
        %1005 = vmatmul.mubr.bf16.gmra.mrb[0].mxu0 %v872
        %v1006 = vpop.f32.mrb[0].mxu0
        %v1007 = vadd.f32 0.0, %v1006
        %v1008 = vpop.f32.mrb[0].mxu0
        %v1009 = vpop.f32.mrb[0].mxu0
        %v1010 = vadd.f32 0.0, %v1009
        %v1011 = vpop.f32.mrb[0].mxu0
        %1012 = vmatprep.mubr.bf16.mxu0 0
        %1013 = vmatmul.mubr.bf16.gmra.mrb[0].mxu0 %v873
        %v1014 = vpop.f32.mrb[0].mxu0
        %v1015 = vadd.f32 0.0, %v1014
        %v1016 = vpop.f32.mrb[0].mxu0
        %v1017 = vpop.f32.mrb[0].mxu0
        %v1018 = vadd.f32 0.0, %v1017
        %v1019 = vpop.f32.mrb[0].mxu0
        %1020 = vmatprep.mubr.bf16.mxu0 0
        %1021 = vmatmul.mubr.bf16.gmra.mrb[0].mxu0 %v874
        %v1022 = vpop.f32.mrb[0].mxu0
        %v1023 = vadd.f32 0.0, %v1022
        %v1024 = vpop.f32.mrb[0].mxu0
        %v1025 = vpop.f32.mrb[0].mxu0
        %v1026 = vadd.f32 0.0, %v1025
        %v1027 = vpop.f32.mrb[0].mxu0
        %1028 = vmatprep.mubr.bf16.mxu0 0
        %1029 = vmatmul.mubr.bf16.gmra.mrb[0].mxu0 %v875
        %v1030 = vpop.f32.mrb[0].mxu0
        %v1031 = vadd.f32 0.0, %v1030
        %v1032 = vpop.f32.mrb[0].mxu0
        %v1033 = vpop.f32.mrb[0].mxu0
        %v1034 = vadd.f32 0.0, %v1033
        %v1035 = vpop.f32.mrb[0].mxu0
        %1036 = vdwg.mxu0
        %v1037 = vld [vmem:[%s575] sm:$0x1]
        %v1039 = vlaneseq
        %v1040 = vshrl.u32 %v1039, 7
        %v1041 = vsub.s32 0, %v1040
        %v1042 = vrot.slane %v1037, %v1041
        %v1044 = vmul.f32 %v975, %v1042
        %v1045 = vmul.f32 %v978, %v1042
        %v1046 = vmul.f32 %v983, %v1042
        %v1047 = vmul.f32 %v986, %v1042
        %v1048 = vmul.f32 %v991, %v1042
        %v1049 = vmul.f32 %v994, %v1042
        %v1050 = vmul.f32 %v999, %v1042
        %v1051 = vmul.f32 %v1002, %v1042
        %v1052 = vmul.f32 %v1007, %v1042
        %v1053 = vmul.f32 %v1010, %v1042
        %v1054 = vmul.f32 %v1015, %v1042
        %v1055 = vmul.f32 %v1018, %v1042
        %v1056 = vmul.f32 %v1023, %v1042
        %v1057 = vmul.f32 %v1026, %v1042
        %v1058 = vmul.f32 %v1031, %v1042
        %v1059 = vmul.f32 %v1034, %v1042
        %v1060 = vmax.f32 %v1044, 0.0
        %v1061 = vmax.f32 %v1045, 0.0
        %v1062 = vmax.f32 %v1046, 0.0
        %v1063 = vmax.f32 %v1047, 0.0
        %v1064 = vmax.f32 %v1048, 0.0
        %v1065 = vmax.f32 %v1049, 0.0
        %v1066 = vmax.f32 %v1050, 0.0
        %v1067 = vmax.f32 %v1051, 0.0
        %v1068 = vmax.f32 %v1052, 0.0
        %v1069 = vmax.f32 %v1053, 0.0
        %v1070 = vmax.f32 %v1054, 0.0
        %v1071 = vmax.f32 %v1055, 0.0
        %v1072 = vmax.f32 %v1056, 0.0
        %v1073 = vmax.f32 %v1057, 0.0
        %v1074 = vmax.f32 %v1058, 0.0
        %v1075 = vmax.f32 %v1059, 0.0
        %1077 = vset.pattern.permute.xlu0 0
        %1078 = vperm.xlu0 %1077, %v852
        %v1079 = vpop.permute.xlu0 %1078
        %1082 = vset.pattern.permute.xlu0 0
        %1083 = vperm.xlu0 %1082, %v853
        %v1084 = vpop.permute.xlu0 %1083
        %1087 = vset.pattern.permute.xlu0 0
        %1088 = vperm.xlu0 %1087, %v854
        %v1089 = vpop.permute.xlu0 %1088
        %1092 = vset.pattern.permute.xlu0 0
        %1093 = vperm.xlu0 %1092, %v855
        %v1094 = vpop.permute.xlu0 %1093
        %1097 = vset.pattern.permute.xlu0 0
        %1098 = vperm.xlu0 %1097, %v856
        %v1099 = vpop.permute.xlu0 %1098
        %1102 = vset.pattern.permute.xlu0 0
        %1103 = vperm.xlu0 %1102, %v857
        %v1104 = vpop.permute.xlu0 %1103
        %1107 = vset.pattern.permute.xlu0 0
        %1108 = vperm.xlu0 %1107, %v858
        %v1109 = vpop.permute.xlu0 %1108
        %1112 = vset.pattern.permute.xlu0 0
        %1113 = vperm.xlu0 %1112, %v859
        %v1114 = vpop.permute.xlu0 %1113
        %1117 = vset.pattern.permute.xlu0 0
        %1118 = vperm.xlu0 %1117, %v860
        %v1119 = vpop.permute.xlu0 %1118
        %1122 = vset.pattern.permute.xlu0 0
        %1123 = vperm.xlu0 %1122, %v861
        %v1124 = vpop.permute.xlu0 %1123
        %1127 = vset.pattern.permute.xlu0 0
        %1128 = vperm.xlu0 %1127, %v862
        %v1129 = vpop.permute.xlu0 %1128
        %1132 = vset.pattern.permute.xlu0 0
        %1133 = vperm.xlu0 %1132, %v863
        %v1134 = vpop.permute.xlu0 %1133
        %1137 = vset.pattern.permute.xlu0 0
        %1138 = vperm.xlu0 %1137, %v864
        %v1139 = vpop.permute.xlu0 %1138
        %1142 = vset.pattern.permute.xlu0 0
        %1143 = vperm.xlu0 %1142, %v865
        %v1144 = vpop.permute.xlu0 %1143
        %1147 = vset.pattern.permute.xlu0 0
        %1148 = vperm.xlu0 %1147, %v866
        %v1149 = vpop.permute.xlu0 %1148
        %1152 = vset.pattern.permute.xlu0 0
        %1153 = vperm.xlu0 %1152, %v867
        %v1154 = vpop.permute.xlu0 %1153
        %v1156 = vmul.f32 %v1060, %v1079
        %v1157 = vmul.f32 %v1061, %v1084
        %v1158 = vmul.f32 %v1062, %v1089
        %v1159 = vmul.f32 %v1063, %v1094
        %v1160 = vmul.f32 %v1064, %v1099
        %v1161 = vmul.f32 %v1065, %v1104
        %v1162 = vmul.f32 %v1066, %v1109
        %v1163 = vmul.f32 %v1067, %v1114
        %v1164 = vmul.f32 %v1068, %v1119
        %v1165 = vmul.f32 %v1069, %v1124
        %v1166 = vmul.f32 %v1070, %v1129
        %v1167 = vmul.f32 %v1071, %v1134
        %v1168 = vmul.f32 %v1072, %v1139
        %v1169 = vmul.f32 %v1073, %v1144
        %v1170 = vmul.f32 %v1074, %v1149
        %v1171 = vmul.f32 %v1075, %v1154
        %v1172 = vpack.c.bf16 %v1157, %v1156
        %v1173 = vpack.c.bf16 %v1159, %v1158
        %v1174 = vpack.c.bf16 %v1161, %v1160
        %v1175 = vpack.c.bf16 %v1163, %v1162
        %v1176 = vpack.c.bf16 %v1165, %v1164
        %v1177 = vpack.c.bf16 %v1167, %v1166
        %v1178 = vpack.c.bf16 %v1169, %v1168
        %v1179 = vpack.c.bf16 %v1171, %v1170
        %v1180 = vld [vmem:[%s6] sm:$0xf]
        %v1181 = vld [vmem:[%s6 + $0x4] sm:$0xf]
        %v1182 = vld [vmem:[%s6 + $0x8] sm:$0xf]
        %v1183 = vld [vmem:[%s6 + $0xc] sm:$0xf]
        %v1184 = vld [vmem:[%s6 + $0x10] sm:$0xf]
        %v1185 = vld [vmem:[%s6 + $0x14] sm:$0xf]
        %v1186 = vld [vmem:[%s6 + $0x18] sm:$0xf]
        %v1187 = vld [vmem:[%s6 + $0x1c] sm:$0xf]
        %v1188 = vld [vmem:[%s6 + $0x20] sm:$0xf]
        %v1189 = vld [vmem:[%s6 + $0x24] sm:$0xf]
        %v1190 = vld [vmem:[%s6 + $0x28] sm:$0xf]
        %v1191 = vld [vmem:[%s6 + $0x2c] sm:$0xf]
        %v1192 = vld [vmem:[%s6 + $0x30] sm:$0xf]
        %v1193 = vld [vmem:[%s6 + $0x34] sm:$0xf]
        %v1194 = vld [vmem:[%s6 + $0x38] sm:$0xf]
        %v1195 = vld [vmem:[%s6 + $0x3c] sm:$0xf]
        %v1212 = vunpack.c.l.b16 %v1180
        %v1213 = vunpack.c.l.b16 %v1181
        %v1214 = vunpack.c.l.b16 %v1182
        %v1215 = vunpack.c.l.b16 %v1183
        %v1216 = vunpack.c.l.b16 %v1184
        %v1217 = vunpack.c.l.b16 %v1185
        %v1218 = vunpack.c.l.b16 %v1186
        %v1219 = vunpack.c.l.b16 %v1187
        %v1220 = vunpack.c.l.b16 %v1188
        %v1221 = vunpack.c.l.b16 %v1189
        %v1222 = vunpack.c.l.b16 %v1190
        %v1223 = vunpack.c.l.b16 %v1191
        %v1224 = vunpack.c.l.b16 %v1192
        %v1225 = vunpack.c.l.b16 %v1193
        %v1226 = vunpack.c.l.b16 %v1194
        %v1227 = vunpack.c.l.b16 %v1195
        %v1228 = vpack.c.b16 %v1213, %v1212
        %v1229 = vpack.c.b16 %v1215, %v1214
        %v1230 = vpack.c.b16 %v1217, %v1216
        %v1231 = vpack.c.b16 %v1219, %v1218
        %v1232 = vpack.c.b16 %v1221, %v1220
        %v1233 = vpack.c.b16 %v1223, %v1222
        %v1234 = vpack.c.b16 %v1225, %v1224
        %v1235 = vpack.c.b16 %v1227, %v1226
        %1244 = vmatprep.subr.bf16.mxu0 0
        %1245 = vmatpush1.bf16.msra.mxu0 %v1228
        %1246 = vmatprep.subr.bf16.mxu0 0
        %1247 = vmatpush1.bf16.msra.mxu0 %v1229
        %1248 = vmatprep.subr.bf16.mxu0 0
        %1249 = vmatpush1.bf16.msra.mxu0 %v1230
        %1250 = vmatprep.subr.bf16.mxu0 0
        %1251 = vmatpush1.bf16.msra.mxu0 %v1231
        %1252 = vmatprep.subr.bf16.mxu0 0
        %1253 = vmatpush1.bf16.msra.mxu0 %v1232
        %1254 = vmatprep.subr.bf16.mxu0 0
        %1255 = vmatpush1.bf16.msra.mxu0 %v1233
        %1256 = vmatprep.subr.bf16.mxu0 0
        %1257 = vmatpush1.bf16.msra.mxu0 %v1234
        %1258 = vmatprep.subr.bf16.mxu0 0
        %1259 = vmatpush1.bf16.msra.mxu0 %v1235
        %1260 = vmatprep.subr.bf16.mxu0 0
        %1261 = vmatpush1.bf16.msra.mxu0 0
        %1262 = vmatprep.subr.bf16.mxu0 0
        %1263 = vmatpush1.bf16.msra.mxu0 0
        %1264 = vmatprep.subr.bf16.mxu0 0
        %1265 = vmatpush1.bf16.msra.mxu0 0
        %1266 = vmatprep.subr.bf16.mxu0 0
        %1267 = vmatpush1.bf16.msra.mxu0 0
        %1268 = vmatprep.subr.bf16.mxu0 0
        %1269 = vmatpush1.bf16.msra.mxu0 0
        %1270 = vmatprep.subr.bf16.mxu0 0
        %1271 = vmatpush1.bf16.msra.mxu0 0
        %1272 = vmatprep.subr.bf16.mxu0 0
        %1273 = vmatpush1.bf16.msra.mxu0 0
        %1274 = vmatprep.subr.bf16.mxu0 0
        %1275 = vmatpush1.bf16.msra.mxu0 0
        %1276 = vmatprep.mubr.bf16.mxu0 0
        %1277 = vmatmul.mubr.bf16.gmra.mrb[0].mxu0 %v1172
        %v1278 = vpop.f32.mrb[0].mxu0
        %v1279 = vadd.f32 0.0, %v1278
        %v1280 = vpop.f32.mrb[0].mxu0
        %v1281 = vpop.f32.mrb[0].mxu0
        %v1282 = vadd.f32 0.0, %v1281
        %v1283 = vpop.f32.mrb[0].mxu0
        %1284 = vmatprep.mubr.bf16.mxu0 0
        %1285 = vmatmul.mubr.bf16.gmra.mrb[0].mxu0 %v1173
        %v1286 = vpop.f32.mrb[0].mxu0
        %v1287 = vadd.f32 0.0, %v1286
        %v1288 = vpop.f32.mrb[0].mxu0
        %v1289 = vpop.f32.mrb[0].mxu0
        %v1290 = vadd.f32 0.0, %v1289
        %v1291 = vpop.f32.mrb[0].mxu0
        %1292 = vmatprep.mubr.bf16.mxu0 0
        %1293 = vmatmul.mubr.bf16.gmra.mrb[0].mxu0 %v1174
        %v1294 = vpop.f32.mrb[0].mxu0
        %v1295 = vadd.f32 0.0, %v1294
        %v1296 = vpop.f32.mrb[0].mxu0
        %v1297 = vpop.f32.mrb[0].mxu0
        %v1298 = vadd.f32 0.0, %v1297
        %v1299 = vpop.f32.mrb[0].mxu0
        %1300 = vmatprep.mubr.bf16.mxu0 0
        %1301 = vmatmul.mubr.bf16.gmra.mrb[0].mxu0 %v1175
        %v1302 = vpop.f32.mrb[0].mxu0
        %v1303 = vadd.f32 0.0, %v1302
        %v1304 = vpop.f32.mrb[0].mxu0
        %v1305 = vpop.f32.mrb[0].mxu0
        %v1306 = vadd.f32 0.0, %v1305
        %v1307 = vpop.f32.mrb[0].mxu0
        %1308 = vmatprep.mubr.bf16.mxu0 0
        %1309 = vmatmul.mubr.bf16.gmra.mrb[0].mxu0 %v1176
        %v1310 = vpop.f32.mrb[0].mxu0
        %v1311 = vadd.f32 0.0, %v1310
        %v1312 = vpop.f32.mrb[0].mxu0
        %v1313 = vpop.f32.mrb[0].mxu0
        %v1314 = vadd.f32 0.0, %v1313
        %v1315 = vpop.f32.mrb[0].mxu0
        %1316 = vmatprep.mubr.bf16.mxu0 0
        %1317 = vmatmul.mubr.bf16.gmra.mrb[0].mxu0 %v1177
        %v1318 = vpop.f32.mrb[0].mxu0
        %v1319 = vadd.f32 0.0, %v1318
        %v1320 = vpop.f32.mrb[0].mxu0
        %v1321 = vpop.f32.mrb[0].mxu0
        %v1322 = vadd.f32 0.0, %v1321
        %v1323 = vpop.f32.mrb[0].mxu0
        %1324 = vmatprep.mubr.bf16.mxu0 0
        %1325 = vmatmul.mubr.bf16.gmra.mrb[0].mxu0 %v1178
        %v1326 = vpop.f32.mrb[0].mxu0
        %v1327 = vadd.f32 0.0, %v1326
        %v1328 = vpop.f32.mrb[0].mxu0
        %v1329 = vpop.f32.mrb[0].mxu0
        %v1330 = vadd.f32 0.0, %v1329
        %v1331 = vpop.f32.mrb[0].mxu0
        %1332 = vmatprep.mubr.bf16.mxu0 0
        %1333 = vmatmul.mubr.bf16.gmra.mrb[0].mxu0 %v1179
        %v1334 = vpop.f32.mrb[0].mxu0
        %v1335 = vadd.f32 0.0, %v1334
        %v1336 = vpop.f32.mrb[0].mxu0
        %v1337 = vpop.f32.mrb[0].mxu0
        %v1338 = vadd.f32 0.0, %v1337
        %v1339 = vpop.f32.mrb[0].mxu0
        %1340 = vdwg.mxu0
        %v1341 = vld [vmem:[%s7] sm:$0x1]
        %v1343 = vlaneseq
        %v1344 = vshrl.u32 %v1343, 7
        %v1345 = vsub.s32 0, %v1344
        %v1346 = vrot.slane %v1341, %v1345
        %v1348 = vadd.f32 %v1279, %v1346
        %v1349 = vadd.f32 %v1282, %v1346
        %v1350 = vadd.f32 %v1287, %v1346
        %v1351 = vadd.f32 %v1290, %v1346
        %v1352 = vadd.f32 %v1295, %v1346
        %v1353 = vadd.f32 %v1298, %v1346
        %v1354 = vadd.f32 %v1303, %v1346
        %v1355 = vadd.f32 %v1306, %v1346
        %v1356 = vadd.f32 %v1311, %v1346
        %v1357 = vadd.f32 %v1314, %v1346
        %v1358 = vadd.f32 %v1319, %v1346
        %v1359 = vadd.f32 %v1322, %v1346
        %v1360 = vadd.f32 %v1327, %v1346
        %v1361 = vadd.f32 %v1330, %v1346
        %v1362 = vadd.f32 %v1335, %v1346
        %v1363 = vadd.f32 %v1338, %v1346
        %v1364 = vmax.f32 %v1348, 0.0
        %v1365 = vmax.f32 %v1349, 0.0
        %v1366 = vmax.f32 %v1350, 0.0
        %v1367 = vmax.f32 %v1351, 0.0
        %v1368 = vmax.f32 %v1352, 0.0
        %v1369 = vmax.f32 %v1353, 0.0
        %v1370 = vmax.f32 %v1354, 0.0
        %v1371 = vmax.f32 %v1355, 0.0
        %v1372 = vmax.f32 %v1356, 0.0
        %v1373 = vmax.f32 %v1357, 0.0
        %v1374 = vmax.f32 %v1358, 0.0
        %v1375 = vmax.f32 %v1359, 0.0
        %v1376 = vmax.f32 %v1360, 0.0
        %v1377 = vmax.f32 %v1361, 0.0
        %v1378 = vmax.f32 %v1362, 0.0
        %v1379 = vmax.f32 %v1363, 0.0
        %v1380 = vmul.f32 %v1364, %v1079
        %v1381 = vmul.f32 %v1365, %v1084
        %v1382 = vmul.f32 %v1366, %v1089
        %v1383 = vmul.f32 %v1367, %v1094
        %v1384 = vmul.f32 %v1368, %v1099
        %v1385 = vmul.f32 %v1369, %v1104
        %v1386 = vmul.f32 %v1370, %v1109
        %v1387 = vmul.f32 %v1371, %v1114
        %v1388 = vmul.f32 %v1372, %v1119
        %v1389 = vmul.f32 %v1373, %v1124
        %v1390 = vmul.f32 %v1374, %v1129
        %v1391 = vmul.f32 %v1375, %v1134
        %v1392 = vmul.f32 %v1376, %v1139
        %v1393 = vmul.f32 %v1377, %v1144
        %v1394 = vmul.f32 %v1378, %v1149
        %v1395 = vmul.f32 %v1379, %v1154
        %v1396 = vld [vmem:[%s8] sm:$0x1]
        %v1398 = vlaneseq
        %v1399 = vshrl.u32 %v1398, 7
        %v1400 = vsub.s32 0, %v1399
        %v1401 = vrot.slane %v1396, %v1400
        %v1403 = vmul.f32 %v1380, %v1401
        %v1404 = vmul.f32 %v1381, %v1401
        %v1405 = vmul.f32 %v1382, %v1401
        %v1406 = vmul.f32 %v1383, %v1401
        %v1407 = vmul.f32 %v1384, %v1401
        %v1408 = vmul.f32 %v1385, %v1401
        %v1409 = vmul.f32 %v1386, %v1401
        %v1410 = vmul.f32 %v1387, %v1401
        %v1411 = vmul.f32 %v1388, %v1401
        %v1412 = vmul.f32 %v1389, %v1401
        %v1413 = vmul.f32 %v1390, %v1401
        %v1414 = vmul.f32 %v1391, %v1401
        %v1415 = vmul.f32 %v1392, %v1401
        %v1416 = vmul.f32 %v1393, %v1401
        %v1417 = vmul.f32 %v1394, %v1401
        %v1418 = vmul.f32 %v1395, %v1401
        %1419 = vadd.xlane.f32.xlu0 %v1403
        %v1420 = vpop.xlane.xlu0 %1419
        %1421 = vadd.xlane.f32.xlu0 %v1404
        %v1422 = vpop.xlane.xlu0 %1421
        %1423 = vadd.xlane.f32.xlu0 %v1405
        %v1424 = vpop.xlane.xlu0 %1423
        %1425 = vadd.xlane.f32.xlu0 %v1406
        %v1426 = vpop.xlane.xlu0 %1425
        %1427 = vadd.xlane.f32.xlu0 %v1407
        %v1428 = vpop.xlane.xlu0 %1427
        %1429 = vadd.xlane.f32.xlu0 %v1408
        %v1430 = vpop.xlane.xlu0 %1429
        %1431 = vadd.xlane.f32.xlu0 %v1409
        %v1432 = vpop.xlane.xlu0 %1431
        %1433 = vadd.xlane.f32.xlu0 %v1410
        %v1434 = vpop.xlane.xlu0 %1433
        %1435 = vadd.xlane.f32.xlu0 %v1411
        %v1436 = vpop.xlane.xlu0 %1435
        %1437 = vadd.xlane.f32.xlu0 %v1412
        %v1438 = vpop.xlane.xlu0 %1437
        %1439 = vadd.xlane.f32.xlu0 %v1413
        %v1440 = vpop.xlane.xlu0 %1439
        %1441 = vadd.xlane.f32.xlu0 %v1414
        %v1442 = vpop.xlane.xlu0 %1441
        %1443 = vadd.xlane.f32.xlu0 %v1415
        %v1444 = vpop.xlane.xlu0 %1443
        %1445 = vadd.xlane.f32.xlu0 %v1416
        %v1446 = vpop.xlane.xlu0 %1445
        %1447 = vadd.xlane.f32.xlu0 %v1417
        %v1448 = vpop.xlane.xlu0 %1447
        %1449 = vadd.xlane.f32.xlu0 %v1418
        %v1450 = vpop.xlane.xlu0 %1449
        %v1451 = vld [vmem:[#allocation2] sm:$0x1]
        %v1453 = vlaneseq
        %v1454 = vshrl.u32 %v1453, 7
        %v1455 = vsub.s32 0, %v1454
        %v1456 = vrot.slane %v1451, %v1455
        %1457 = vset.pattern.permute.xlu0 0
        %1458 = vperm.xlu0 %1457, %v1456
        %v1459 = vpop.permute.xlu0 %1458
        %v1461 = vadd.f32 %v1420, %v1459
        %v1462 = vadd.f32 %v1422, %v1459
        %v1463 = vadd.f32 %v1424, %v1459
        %v1464 = vadd.f32 %v1426, %v1459
        %v1465 = vadd.f32 %v1428, %v1459
        %v1466 = vadd.f32 %v1430, %v1459
        %v1467 = vadd.f32 %v1432, %v1459
        %v1468 = vadd.f32 %v1434, %v1459
        %v1469 = vadd.f32 %v1436, %v1459
        %v1470 = vadd.f32 %v1438, %v1459
        %v1471 = vadd.f32 %v1440, %v1459
        %v1472 = vadd.f32 %v1442, %v1459
        %v1473 = vadd.f32 %v1444, %v1459
        %v1474 = vadd.f32 %v1446, %v1459
        %v1475 = vadd.f32 %v1448, %v1459
        %v1476 = vadd.f32 %v1450, %v1459
        %v1477 = vxor.u32 %v1461, 2147483648
        %v1478 = vxor.u32 %v1462, 2147483648
        %v1479 = vxor.u32 %v1463, 2147483648
        %v1480 = vxor.u32 %v1464, 2147483648
        %v1481 = vxor.u32 %v1465, 2147483648
        %v1482 = vxor.u32 %v1466, 2147483648
        %v1483 = vxor.u32 %v1467, 2147483648
        %v1484 = vxor.u32 %v1468, 2147483648
        %v1485 = vxor.u32 %v1469, 2147483648
        %v1486 = vxor.u32 %v1470, 2147483648
        %v1487 = vxor.u32 %v1471, 2147483648
        %v1488 = vxor.u32 %v1472, 2147483648
        %v1489 = vxor.u32 %v1473, 2147483648
        %v1490 = vxor.u32 %v1474, 2147483648
        %v1491 = vxor.u32 %v1475, 2147483648
        %v1492 = vxor.u32 %v1476, 2147483648
        %v1493 = vmul.f32 %v1477, 1.442695
        %v1494 = vpow.pop %v1493
        %v1495 = vmul.f32 %v1478, 1.442695
        %v1496 = vpow.pop %v1495
        %v1497 = vmul.f32 %v1479, 1.442695
        %v1498 = vpow.pop %v1497
        %v1499 = vmul.f32 %v1480, 1.442695
        %v1500 = vpow.pop %v1499
        %v1501 = vmul.f32 %v1481, 1.442695
        %v1502 = vpow.pop %v1501
        %v1503 = vmul.f32 %v1482, 1.442695
        %v1504 = vpow.pop %v1503
        %v1505 = vmul.f32 %v1483, 1.442695
        %v1506 = vpow.pop %v1505
        %v1507 = vmul.f32 %v1484, 1.442695
        %v1508 = vpow.pop %v1507
        %v1509 = vmul.f32 %v1485, 1.442695
        %v1510 = vpow.pop %v1509
        %v1511 = vmul.f32 %v1486, 1.442695
        %v1512 = vpow.pop %v1511
        %v1513 = vmul.f32 %v1487, 1.442695
        %v1514 = vpow.pop %v1513
        %v1515 = vmul.f32 %v1488, 1.442695
        %v1516 = vpow.pop %v1515
        %v1517 = vmul.f32 %v1489, 1.442695
        %v1518 = vpow.pop %v1517
        %v1519 = vmul.f32 %v1490, 1.442695
        %v1520 = vpow.pop %v1519
        %v1521 = vmul.f32 %v1491, 1.442695
        %v1522 = vpow.pop %v1521
        %v1523 = vmul.f32 %v1492, 1.442695
        %v1524 = vpow.pop %v1523
        %v1525 = vadd.f32 %v1494, 1.0
        %v1526 = vadd.f32 %v1496, 1.0
        %v1527 = vadd.f32 %v1498, 1.0
        %v1528 = vadd.f32 %v1500, 1.0
        %v1529 = vadd.f32 %v1502, 1.0
        %v1530 = vadd.f32 %v1504, 1.0
        %v1531 = vadd.f32 %v1506, 1.0
        %v1532 = vadd.f32 %v1508, 1.0
        %v1533 = vadd.f32 %v1510, 1.0
        %v1534 = vadd.f32 %v1512, 1.0
        %v1535 = vadd.f32 %v1514, 1.0
        %v1536 = vadd.f32 %v1516, 1.0
        %v1537 = vadd.f32 %v1518, 1.0
        %v1538 = vadd.f32 %v1520, 1.0
        %v1539 = vadd.f32 %v1522, 1.0
        %v1540 = vadd.f32 %v1524, 1.0
        %v1541 = vrcp.pop %v1525
        %v1542 = vmul.f32 1.0, %v1541
        %v1543 = vrcp.pop %v1526
        %v1544 = vmul.f32 1.0, %v1543
        %v1545 = vrcp.pop %v1527
        %v1546 = vmul.f32 1.0, %v1545
        %v1547 = vrcp.pop %v1528
        %v1548 = vmul.f32 1.0, %v1547
        %v1549 = vrcp.pop %v1529
        %v1550 = vmul.f32 1.0, %v1549
        %v1551 = vrcp.pop %v1530
        %v1552 = vmul.f32 1.0, %v1551
        %v1553 = vrcp.pop %v1531
        %v1554 = vmul.f32 1.0, %v1553
        %v1555 = vrcp.pop %v1532
        %v1556 = vmul.f32 1.0, %v1555
        %v1557 = vrcp.pop %v1533
        %v1558 = vmul.f32 1.0, %v1557
        %v1559 = vrcp.pop %v1534
        %v1560 = vmul.f32 1.0, %v1559
        %v1561 = vrcp.pop %v1535
        %v1562 = vmul.f32 1.0, %v1561
        %v1563 = vrcp.pop %v1536
        %v1564 = vmul.f32 1.0, %v1563
        %v1565 = vrcp.pop %v1537
        %v1566 = vmul.f32 1.0, %v1565
        %v1567 = vrcp.pop %v1538
        %v1568 = vmul.f32 1.0, %v1567
        %v1569 = vrcp.pop %v1539
        %v1570 = vmul.f32 1.0, %v1569
        %v1571 = vrcp.pop %v1540
        %v1572 = vmul.f32 1.0, %v1571
        %v1574 = vlaneseq
        %v1575 = vshrl.u32 %v1574, 7
        %v1576 = vsub.s32 0, %v1575
        %v1577 = vrot.slane %v617, %v1576
        %1579 = vbcast.lane.b32.xlu0 %v1577, 256
        %v1580 = vpop.permute.xlu0 %1579
        %s1582 = sor.u32 256, 8
        %1583 = vbcast.lane.b32.xlu0 %v1577, %s1582
        %v1584 = vpop.permute.xlu0 %1583
        %v1585 = vlaneseq
        %v1586 = vshrl.u32 %v1585, 7
        %v1587 = vsub.s32 1, %v1586
        %v1588 = vrot.slane %v617, %v1587
        %1590 = vbcast.lane.b32.xlu0 %v1588, 256
        %v1591 = vpop.permute.xlu0 %1590
        %s1593 = sor.u32 256, 8
        %1594 = vbcast.lane.b32.xlu0 %v1588, %s1593
        %v1595 = vpop.permute.xlu0 %1594
        %v1596 = vlaneseq
        %v1597 = vshrl.u32 %v1596, 7
        %v1598 = vsub.s32 2, %v1597
        %v1599 = vrot.slane %v617, %v1598
        %1601 = vbcast.lane.b32.xlu0 %v1599, 256
        %v1602 = vpop.permute.xlu0 %1601
        %s1604 = sor.u32 256, 8
        %1605 = vbcast.lane.b32.xlu0 %v1599, %s1604
        %v1606 = vpop.permute.xlu0 %1605
        %v1607 = vlaneseq
        %v1608 = vshrl.u32 %v1607, 7
        %v1609 = vsub.s32 3, %v1608
        %v1610 = vrot.slane %v617, %v1609
        %1612 = vbcast.lane.b32.xlu0 %v1610, 256
        %v1613 = vpop.permute.xlu0 %1612
        %s1615 = sor.u32 256, 8
        %1616 = vbcast.lane.b32.xlu0 %v1610, %s1615
        %v1617 = vpop.permute.xlu0 %1616
        %v1618 = vlaneseq
        %v1619 = vshrl.u32 %v1618, 7
        %v1620 = vsub.s32 4, %v1619
        %v1621 = vrot.slane %v617, %v1620
        %1623 = vbcast.lane.b32.xlu0 %v1621, 256
        %v1624 = vpop.permute.xlu0 %1623
        %s1626 = sor.u32 256, 8
        %1627 = vbcast.lane.b32.xlu0 %v1621, %s1626
        %v1628 = vpop.permute.xlu0 %1627
        %v1629 = vlaneseq
        %v1630 = vshrl.u32 %v1629, 7
        %v1631 = vsub.s32 5, %v1630
        %v1632 = vrot.slane %v617, %v1631
        %1634 = vbcast.lane.b32.xlu0 %v1632, 256
        %v1635 = vpop.permute.xlu0 %1634
        %s1637 = sor.u32 256, 8
        %1638 = vbcast.lane.b32.xlu0 %v1632, %s1637
        %v1639 = vpop.permute.xlu0 %1638
        %v1640 = vlaneseq
        %v1641 = vshrl.u32 %v1640, 7
        %v1642 = vsub.s32 6, %v1641
        %v1643 = vrot.slane %v617, %v1642
        %1645 = vbcast.lane.b32.xlu0 %v1643, 256
        %v1646 = vpop.permute.xlu0 %1645
        %s1648 = sor.u32 256, 8
        %1649 = vbcast.lane.b32.xlu0 %v1643, %s1648
        %v1650 = vpop.permute.xlu0 %1649
        %v1651 = vlaneseq
        %v1652 = vshrl.u32 %v1651, 7
        %v1653 = vsub.s32 7, %v1652
        %v1654 = vrot.slane %v617, %v1653
        %1656 = vbcast.lane.b32.xlu0 %v1654, 256
        %v1657 = vpop.permute.xlu0 %1656
        %s1659 = sor.u32 256, 8
        %1660 = vbcast.lane.b32.xlu0 %v1654, %s1659
        %v1661 = vpop.permute.xlu0 %1660
        %v1678 = vmul.f32 %v1542, %v1580
        %v1679 = vmul.f32 %v1544, %v1584
        %v1680 = vmul.f32 %v1546, %v1591
        %v1681 = vmul.f32 %v1548, %v1595
        %v1682 = vmul.f32 %v1550, %v1602
        %v1683 = vmul.f32 %v1552, %v1606
        %v1684 = vmul.f32 %v1554, %v1613
        %v1685 = vmul.f32 %v1556, %v1617
        %v1686 = vmul.f32 %v1558, %v1624
        %v1687 = vmul.f32 %v1560, %v1628
        %v1688 = vmul.f32 %v1562, %v1635
        %v1689 = vmul.f32 %v1564, %v1639
        %v1690 = vmul.f32 %v1566, %v1646
        %v1691 = vmul.f32 %v1568, %v1650
        %v1692 = vmul.f32 %v1570, %v1657
        %v1693 = vmul.f32 %v1572, %v1661
        %1710 = vset.pattern.permute.xlu0 0
        %1711 = vperm.xlu0 %1710, %v1678
        %v1712 = vpop.permute.xlu0 %1711
        %1713 = vset.pattern.permute.xlu0 0
        %1714 = vperm.xlu0 %1713, %v1679
        %v1715 = vpop.permute.xlu0 %1714
        %1716 = vset.pattern.permute.xlu0 0
        %1717 = vperm.xlu0 %1716, %v1680
        %v1718 = vpop.permute.xlu0 %1717
        %1719 = vset.pattern.permute.xlu0 0
        %1720 = vperm.xlu0 %1719, %v1681
        %v1721 = vpop.permute.xlu0 %1720
        %1722 = vset.pattern.permute.xlu0 0
        %1723 = vperm.xlu0 %1722, %v1682
        %v1724 = vpop.permute.xlu0 %1723
        %1725 = vset.pattern.permute.xlu0 0
        %1726 = vperm.xlu0 %1725, %v1683
        %v1727 = vpop.permute.xlu0 %1726
        %1728 = vset.pattern.permute.xlu0 0
        %1729 = vperm.xlu0 %1728, %v1684
        %v1730 = vpop.permute.xlu0 %1729
        %1731 = vset.pattern.permute.xlu0 0
        %1732 = vperm.xlu0 %1731, %v1685
        %v1733 = vpop.permute.xlu0 %1732
        %1734 = vset.pattern.permute.xlu0 0
        %1735 = vperm.xlu0 %1734, %v1686
        %v1736 = vpop.permute.xlu0 %1735
        %1737 = vset.pattern.permute.xlu0 0
        %1738 = vperm.xlu0 %1737, %v1687
        %v1739 = vpop.permute.xlu0 %1738
        %1740 = vset.pattern.permute.xlu0 0
        %1741 = vperm.xlu0 %1740, %v1688
        %v1742 = vpop.permute.xlu0 %1741
        %1743 = vset.pattern.permute.xlu0 0
        %1744 = vperm.xlu0 %1743, %v1689
        %v1745 = vpop.permute.xlu0 %1744
        %1746 = vset.pattern.permute.xlu0 0
        %1747 = vperm.xlu0 %1746, %v1690
        %v1748 = vpop.permute.xlu0 %1747
        %1749 = vset.pattern.permute.xlu0 0
        %1750 = vperm.xlu0 %1749, %v1691
        %v1751 = vpop.permute.xlu0 %1750
        %1752 = vset.pattern.permute.xlu0 0
        %1753 = vperm.xlu0 %1752, %v1692
        %v1754 = vpop.permute.xlu0 %1753
        %1755 = vset.pattern.permute.xlu0 0
        %1756 = vperm.xlu0 %1755, %v1693
        %v1757 = vpop.permute.xlu0 %1756
        %v1758 = vlaneseq
        %v1759 = vand.u32 %v1758, 127
        %v1760 = vlaneseq
        %v1761 = vshrl.u32 %v1760, 7
        %v1762 = vsub.s32 %v1759, %v1761
        %v1763 = vrot.slane %v1712, %v1762
        %v1764 = vadd.s32 %v1759, 4294967288
        %v1765 = vlaneseq
        %v1766 = vshrl.u32 %v1765, 7
        %v1767 = vsub.s32 %v1764, %v1766
        %v1768 = vrot.slane %v1715, %v1767
        %vm1769 = vcmask 130112
        %v1770 = vsel %vm1769, %v1768, %v1763
        %v1771 = vlaneseq
        %v1772 = vshrl.u32 %v1771, 7
        %v1773 = vsub.s32 %v1759, %v1772
        %v1774 = vrot.slane %v1718, %v1773
        %v1775 = vlaneseq
        %v1776 = vshrl.u32 %v1775, 7
        %v1777 = vsub.s32 %v1764, %v1776
        %v1778 = vrot.slane %v1721, %v1777
        %v1779 = vsel %vm1769, %v1778, %v1774
        %v1780 = vlaneseq
        %v1781 = vshrl.u32 %v1780, 7
        %v1782 = vsub.s32 %v1759, %v1781
        %v1783 = vrot.slane %v1724, %v1782
        %v1784 = vlaneseq
        %v1785 = vshrl.u32 %v1784, 7
        %v1786 = vsub.s32 %v1764, %v1785
        %v1787 = vrot.slane %v1727, %v1786
        %v1788 = vsel %vm1769, %v1787, %v1783
        %v1789 = vlaneseq
        %v1790 = vshrl.u32 %v1789, 7
        %v1791 = vsub.s32 %v1759, %v1790
        %v1792 = vrot.slane %v1730, %v1791
        %v1793 = vlaneseq
        %v1794 = vshrl.u32 %v1793, 7
        %v1795 = vsub.s32 %v1764, %v1794
        %v1796 = vrot.slane %v1733, %v1795
        %v1797 = vsel %vm1769, %v1796, %v1792
        %v1798 = vlaneseq
        %v1799 = vshrl.u32 %v1798, 7
        %v1800 = vsub.s32 %v1759, %v1799
        %v1801 = vrot.slane %v1736, %v1800
        %v1802 = vlaneseq
        %v1803 = vshrl.u32 %v1802, 7
        %v1804 = vsub.s32 %v1764, %v1803
        %v1805 = vrot.slane %v1739, %v1804
        %v1806 = vsel %vm1769, %v1805, %v1801
        %v1807 = vlaneseq
        %v1808 = vshrl.u32 %v1807, 7
        %v1809 = vsub.s32 %v1759, %v1808
        %v1810 = vrot.slane %v1742, %v1809
        %v1811 = vlaneseq
        %v1812 = vshrl.u32 %v1811, 7
        %v1813 = vsub.s32 %v1764, %v1812
        %v1814 = vrot.slane %v1745, %v1813
        %v1815 = vsel %vm1769, %v1814, %v1810
        %v1816 = vlaneseq
        %v1817 = vshrl.u32 %v1816, 7
        %v1818 = vsub.s32 %v1759, %v1817
        %v1819 = vrot.slane %v1748, %v1818
        %v1820 = vlaneseq
        %v1821 = vshrl.u32 %v1820, 7
        %v1822 = vsub.s32 %v1764, %v1821
        %v1823 = vrot.slane %v1751, %v1822
        %v1824 = vsel %vm1769, %v1823, %v1819
        %v1825 = vlaneseq
        %v1826 = vshrl.u32 %v1825, 7
        %v1827 = vsub.s32 %v1759, %v1826
        %v1828 = vrot.slane %v1754, %v1827
        %v1829 = vlaneseq
        %v1830 = vshrl.u32 %v1829, 7
        %v1831 = vsub.s32 %v1764, %v1830
        %v1832 = vrot.slane %v1757, %v1831
        %v1833 = vsel %vm1769, %v1832, %v1828
        %vm1834 = vcmask 1041409
        %v1835 = vsel %vm1834, %v1779, %v1770
        %vm1836 = vcmask 1042434
        %v1837 = vsel %vm1836, %v1788, %v1835
        %vm1838 = vcmask 1043459
        %v1839 = vsel %vm1838, %v1797, %v1837
        %vm1840 = vcmask 1044484
        %v1841 = vsel %vm1840, %v1806, %v1839
        %vm1842 = vcmask 1045509
        %v1843 = vsel %vm1842, %v1815, %v1841
        %vm1844 = vcmask 1046534
        %v1845 = vsel %vm1844, %v1824, %v1843
        %vm1846 = vcmask 1047559
        %v1847 = vsel %vm1846, %v1833, %v1845
        %vm1849 = vcmask 130048
        %1850 = vst.msk [vmem:[%s538] sm:$0xff] %vm1849, %v1847
        %v1851 = vld [vmem:[%s583] sm:$0xff]
        %v1852 = vmax.f32 %v1678, 1e-06
        %v1853 = vmax.f32 %v1679, 1e-06
        %v1854 = vmax.f32 %v1680, 1e-06
        %v1855 = vmax.f32 %v1681, 1e-06
        %v1856 = vmax.f32 %v1682, 1e-06
        %v1857 = vmax.f32 %v1683, 1e-06
        %v1858 = vmax.f32 %v1684, 1e-06
        %v1859 = vmax.f32 %v1685, 1e-06
        %v1860 = vmax.f32 %v1686, 1e-06
        %v1861 = vmax.f32 %v1687, 1e-06
        %v1862 = vmax.f32 %v1688, 1e-06
        %v1863 = vmax.f32 %v1689, 1e-06
        %v1864 = vmax.f32 %v1690, 1e-06
        %v1865 = vmax.f32 %v1691, 1e-06
        %v1866 = vmax.f32 %v1692, 1e-06
        %v1867 = vmax.f32 %v1693, 1e-06
        %v1868 = vmin.f32 %v1852, 0.999999
        %v1869 = vmin.f32 %v1853, 0.999999
        %v1870 = vmin.f32 %v1854, 0.999999
        %v1871 = vmin.f32 %v1855, 0.999999
        %v1872 = vmin.f32 %v1856, 0.999999
        %v1873 = vmin.f32 %v1857, 0.999999
        %v1874 = vmin.f32 %v1858, 0.999999
        %v1875 = vmin.f32 %v1859, 0.999999
        %v1876 = vmin.f32 %v1860, 0.999999
        %v1877 = vmin.f32 %v1861, 0.999999
        %v1878 = vmin.f32 %v1862, 0.999999
        %v1879 = vmin.f32 %v1863, 0.999999
        %v1880 = vmin.f32 %v1864, 0.999999
        %v1881 = vmin.f32 %v1865, 0.999999
        %v1882 = vmin.f32 %v1866, 0.999999
        %v1883 = vmin.f32 %v1867, 0.999999
        %v1884 = vlog2.pop %v1868
        %v1885 = vmul.f32 %v1884, 0.6931472
        %v1886 = vlog2.pop %v1869
        %v1887 = vmul.f32 %v1886, 0.6931472
        %v1888 = vlog2.pop %v1870
        %v1889 = vmul.f32 %v1888, 0.6931472
        %v1890 = vlog2.pop %v1871
        %v1891 = vmul.f32 %v1890, 0.6931472
        %v1892 = vlog2.pop %v1872
        %v1893 = vmul.f32 %v1892, 0.6931472
        %v1894 = vlog2.pop %v1873
        %v1895 = vmul.f32 %v1894, 0.6931472
        %v1896 = vlog2.pop %v1874
        %v1897 = vmul.f32 %v1896, 0.6931472
        %v1898 = vlog2.pop %v1875
        %v1899 = vmul.f32 %v1898, 0.6931472
        %v1900 = vlog2.pop %v1876
        %v1901 = vmul.f32 %v1900, 0.6931472
        %v1902 = vlog2.pop %v1877
        %v1903 = vmul.f32 %v1902, 0.6931472
        %v1904 = vlog2.pop %v1878
        %v1905 = vmul.f32 %v1904, 0.6931472
        %v1906 = vlog2.pop %v1879
        %v1907 = vmul.f32 %v1906, 0.6931472
        %v1908 = vlog2.pop %v1880
        %v1909 = vmul.f32 %v1908, 0.6931472
        %v1910 = vlog2.pop %v1881
        %v1911 = vmul.f32 %v1910, 0.6931472
        %v1912 = vlog2.pop %v1882
        %v1913 = vmul.f32 %v1912, 0.6931472
        %v1914 = vlog2.pop %v1883
        %v1915 = vmul.f32 %v1914, 0.6931472
        %1932 = vset.pattern.permute.xlu0 0
        %1933 = vperm.xlu0 %1932, %v1885
        %v1934 = vpop.permute.xlu0 %1933
        %1935 = vset.pattern.permute.xlu0 0
        %1936 = vperm.xlu0 %1935, %v1887
        %v1937 = vpop.permute.xlu0 %1936
        %1938 = vset.pattern.permute.xlu0 0
        %1939 = vperm.xlu0 %1938, %v1889
        %v1940 = vpop.permute.xlu0 %1939
        %1941 = vset.pattern.permute.xlu0 0
        %1942 = vperm.xlu0 %1941, %v1891
        %v1943 = vpop.permute.xlu0 %1942
        %1944 = vset.pattern.permute.xlu0 0
        %1945 = vperm.xlu0 %1944, %v1893
        %v1946 = vpop.permute.xlu0 %1945
        %1947 = vset.pattern.permute.xlu0 0
        %1948 = vperm.xlu0 %1947, %v1895
        %v1949 = vpop.permute.xlu0 %1948
        %1950 = vset.pattern.permute.xlu0 0
        %1951 = vperm.xlu0 %1950, %v1897
        %v1952 = vpop.permute.xlu0 %1951
        %1953 = vset.pattern.permute.xlu0 0
        %1954 = vperm.xlu0 %1953, %v1899
        %v1955 = vpop.permute.xlu0 %1954
        %1956 = vset.pattern.permute.xlu0 0
        %1957 = vperm.xlu0 %1956, %v1901
        %v1958 = vpop.permute.xlu0 %1957
        %1959 = vset.pattern.permute.xlu0 0
        %1960 = vperm.xlu0 %1959, %v1903
        %v1961 = vpop.permute.xlu0 %1960
        %1962 = vset.pattern.permute.xlu0 0
        %1963 = vperm.xlu0 %1962, %v1905
        %v1964 = vpop.permute.xlu0 %1963
        %1965 = vset.pattern.permute.xlu0 0
        %1966 = vperm.xlu0 %1965, %v1907
        %v1967 = vpop.permute.xlu0 %1966
        %1968 = vset.pattern.permute.xlu0 0
        %1969 = vperm.xlu0 %1968, %v1909
        %v1970 = vpop.permute.xlu0 %1969
        %1971 = vset.pattern.permute.xlu0 0
        %1972 = vperm.xlu0 %1971, %v1911
        %v1973 = vpop.permute.xlu0 %1972
        %1974 = vset.pattern.permute.xlu0 0
        %1975 = vperm.xlu0 %1974, %v1913
        %v1976 = vpop.permute.xlu0 %1975
        %1977 = vset.pattern.permute.xlu0 0
        %1978 = vperm.xlu0 %1977, %v1915
        %v1979 = vpop.permute.xlu0 %1978
        %v1980 = vlaneseq
        %v1981 = vshrl.u32 %v1980, 7
        %v1982 = vsub.s32 %v1759, %v1981
        %v1983 = vrot.slane %v1934, %v1982
        %v1984 = vlaneseq
        %v1985 = vshrl.u32 %v1984, 7
        %v1986 = vsub.s32 %v1764, %v1985
        %v1987 = vrot.slane %v1937, %v1986
        %v1988 = vsel %vm1769, %v1987, %v1983
        %v1989 = vlaneseq
        %v1990 = vshrl.u32 %v1989, 7
        %v1991 = vsub.s32 %v1759, %v1990
        %v1992 = vrot.slane %v1940, %v1991
        %v1993 = vlaneseq
        %v1994 = vshrl.u32 %v1993, 7
        %v1995 = vsub.s32 %v1764, %v1994
        %v1996 = vrot.slane %v1943, %v1995
        %v1997 = vsel %vm1769, %v1996, %v1992
        %v1998 = vlaneseq
        %v1999 = vshrl.u32 %v1998, 7
        %v2000 = vsub.s32 %v1759, %v1999
        %v2001 = vrot.slane %v1946, %v2000
        %v2002 = vlaneseq
        %v2003 = vshrl.u32 %v2002, 7
        %v2004 = vsub.s32 %v1764, %v2003
        %v2005 = vrot.slane %v1949, %v2004
        %v2006 = vsel %vm1769, %v2005, %v2001
        %v2007 = vlaneseq
        %v2008 = vshrl.u32 %v2007, 7
        %v2009 = vsub.s32 %v1759, %v2008
        %v2010 = vrot.slane %v1952, %v2009
        %v2011 = vlaneseq
        %v2012 = vshrl.u32 %v2011, 7
        %v2013 = vsub.s32 %v1764, %v2012
        %v2014 = vrot.slane %v1955, %v2013
        %v2015 = vsel %vm1769, %v2014, %v2010
        %v2016 = vlaneseq
        %v2017 = vshrl.u32 %v2016, 7
        %v2018 = vsub.s32 %v1759, %v2017
        %v2019 = vrot.slane %v1958, %v2018
        %v2020 = vlaneseq
        %v2021 = vshrl.u32 %v2020, 7
        %v2022 = vsub.s32 %v1764, %v2021
        %v2023 = vrot.slane %v1961, %v2022
        %v2024 = vsel %vm1769, %v2023, %v2019
        %v2025 = vlaneseq
        %v2026 = vshrl.u32 %v2025, 7
        %v2027 = vsub.s32 %v1759, %v2026
        %v2028 = vrot.slane %v1964, %v2027
        %v2029 = vlaneseq
        %v2030 = vshrl.u32 %v2029, 7
        %v2031 = vsub.s32 %v1764, %v2030
        %v2032 = vrot.slane %v1967, %v2031
        %v2033 = vsel %vm1769, %v2032, %v2028
        %v2034 = vlaneseq
        %v2035 = vshrl.u32 %v2034, 7
        %v2036 = vsub.s32 %v1759, %v2035
        %v2037 = vrot.slane %v1970, %v2036
        %v2038 = vlaneseq
        %v2039 = vshrl.u32 %v2038, 7
        %v2040 = vsub.s32 %v1764, %v2039
        %v2041 = vrot.slane %v1973, %v2040
        %v2042 = vsel %vm1769, %v2041, %v2037
        %v2043 = vlaneseq
        %v2044 = vshrl.u32 %v2043, 7
        %v2045 = vsub.s32 %v1759, %v2044
        %v2046 = vrot.slane %v1976, %v2045
        %v2047 = vlaneseq
        %v2048 = vshrl.u32 %v2047, 7
        %v2049 = vsub.s32 %v1764, %v2048
        %v2050 = vrot.slane %v1979, %v2049
        %v2051 = vsel %vm1769, %v2050, %v2046
        %v2052 = vsel %vm1834, %v1997, %v1988
        %v2053 = vsel %vm1836, %v2006, %v2052
        %v2054 = vsel %vm1838, %v2015, %v2053
        %v2055 = vsel %vm1840, %v2024, %v2054
        %v2056 = vsel %vm1842, %v2033, %v2055
        %v2057 = vsel %vm1844, %v2042, %v2056
        %v2058 = vsel %vm1846, %v2051, %v2057
        %v2060 = vmul.f32 %v1851, %v2058
        %v2061 = vsub.f32 1.0, %v1851
        %v2062 = vsub.f32 1.0, %v1868
        %v2063 = vsub.f32 1.0, %v1869
        %v2064 = vsub.f32 1.0, %v1870
        %v2065 = vsub.f32 1.0, %v1871
        %v2066 = vsub.f32 1.0, %v1872
        %v2067 = vsub.f32 1.0, %v1873
        %v2068 = vsub.f32 1.0, %v1874
        %v2069 = vsub.f32 1.0, %v1875
        %v2070 = vsub.f32 1.0, %v1876
        %v2071 = vsub.f32 1.0, %v1877
        %v2072 = vsub.f32 1.0, %v1878
        %v2073 = vsub.f32 1.0, %v1879
        %v2074 = vsub.f32 1.0, %v1880
        %v2075 = vsub.f32 1.0, %v1881
        %v2076 = vsub.f32 1.0, %v1882
        %v2077 = vsub.f32 1.0, %v1883
        %v2078 = vlog2.pop %v2062
        %v2079 = vmul.f32 %v2078, 0.6931472
        %v2080 = vlog2.pop %v2063
        %v2081 = vmul.f32 %v2080, 0.6931472
        %v2082 = vlog2.pop %v2064
        %v2083 = vmul.f32 %v2082, 0.6931472
        %v2084 = vlog2.pop %v2065
        %v2085 = vmul.f32 %v2084, 0.6931472
        %v2086 = vlog2.pop %v2066
        %v2087 = vmul.f32 %v2086, 0.6931472
        %v2088 = vlog2.pop %v2067
        %v2089 = vmul.f32 %v2088, 0.6931472
        %v2090 = vlog2.pop %v2068
        %v2091 = vmul.f32 %v2090, 0.6931472
        %v2092 = vlog2.pop %v2069
        %v2093 = vmul.f32 %v2092, 0.6931472
        %v2094 = vlog2.pop %v2070
        %v2095 = vmul.f32 %v2094, 0.6931472
        %v2096 = vlog2.pop %v2071
        %v2097 = vmul.f32 %v2096, 0.6931472
        %v2098 = vlog2.pop %v2072
        %v2099 = vmul.f32 %v2098, 0.6931472
        %v2100 = vlog2.pop %v2073
        %v2101 = vmul.f32 %v2100, 0.6931472
        %v2102 = vlog2.pop %v2074
        %v2103 = vmul.f32 %v2102, 0.6931472
        %v2104 = vlog2.pop %v2075
        %v2105 = vmul.f32 %v2104, 0.6931472
        %v2106 = vlog2.pop %v2076
        %v2107 = vmul.f32 %v2106, 0.6931472
        %v2108 = vlog2.pop %v2077
        %v2109 = vmul.f32 %v2108, 0.6931472
        %2126 = vset.pattern.permute.xlu0 0
        %2127 = vperm.xlu0 %2126, %v2079
        %v2128 = vpop.permute.xlu0 %2127
        %2129 = vset.pattern.permute.xlu0 0
        %2130 = vperm.xlu0 %2129, %v2081
        %v2131 = vpop.permute.xlu0 %2130
        %2132 = vset.pattern.permute.xlu0 0
        %2133 = vperm.xlu0 %2132, %v2083
        %v2134 = vpop.permute.xlu0 %2133
        %2135 = vset.pattern.permute.xlu0 0
        %2136 = vperm.xlu0 %2135, %v2085
        %v2137 = vpop.permute.xlu0 %2136
        %2138 = vset.pattern.permute.xlu0 0
        %2139 = vperm.xlu0 %2138, %v2087
        %v2140 = vpop.permute.xlu0 %2139
        %2141 = vset.pattern.permute.xlu0 0
        %2142 = vperm.xlu0 %2141, %v2089
        %v2143 = vpop.permute.xlu0 %2142
        %2144 = vset.pattern.permute.xlu0 0
        %2145 = vperm.xlu0 %2144, %v2091
        %v2146 = vpop.permute.xlu0 %2145
        %2147 = vset.pattern.permute.xlu0 0
        %2148 = vperm.xlu0 %2147, %v2093
        %v2149 = vpop.permute.xlu0 %2148
        %2150 = vset.pattern.permute.xlu0 0
        %2151 = vperm.xlu0 %2150, %v2095
        %v2152 = vpop.permute.xlu0 %2151
        %2153 = vset.pattern.permute.xlu0 0
        %2154 = vperm.xlu0 %2153, %v2097
        %v2155 = vpop.permute.xlu0 %2154
        %2156 = vset.pattern.permute.xlu0 0
        %2157 = vperm.xlu0 %2156, %v2099
        %v2158 = vpop.permute.xlu0 %2157
        %2159 = vset.pattern.permute.xlu0 0
        %2160 = vperm.xlu0 %2159, %v2101
        %v2161 = vpop.permute.xlu0 %2160
        %2162 = vset.pattern.permute.xlu0 0
        %2163 = vperm.xlu0 %2162, %v2103
        %v2164 = vpop.permute.xlu0 %2163
        %2165 = vset.pattern.permute.xlu0 0
        %2166 = vperm.xlu0 %2165, %v2105
        %v2167 = vpop.permute.xlu0 %2166
        %2168 = vset.pattern.permute.xlu0 0
        %2169 = vperm.xlu0 %2168, %v2107
        %v2170 = vpop.permute.xlu0 %2169
        %2171 = vset.pattern.permute.xlu0 0
        %2172 = vperm.xlu0 %2171, %v2109
        %v2173 = vpop.permute.xlu0 %2172
        %v2174 = vlaneseq
        %v2175 = vshrl.u32 %v2174, 7
        %v2176 = vsub.s32 %v1759, %v2175
        %v2177 = vrot.slane %v2128, %v2176
        %v2178 = vlaneseq
        %v2179 = vshrl.u32 %v2178, 7
        %v2180 = vsub.s32 %v1764, %v2179
        %v2181 = vrot.slane %v2131, %v2180
        %v2182 = vsel %vm1769, %v2181, %v2177
        %v2183 = vlaneseq
        %v2184 = vshrl.u32 %v2183, 7
        %v2185 = vsub.s32 %v1759, %v2184
        %v2186 = vrot.slane %v2134, %v2185
        %v2187 = vlaneseq
        %v2188 = vshrl.u32 %v2187, 7
        %v2189 = vsub.s32 %v1764, %v2188
        %v2190 = vrot.slane %v2137, %v2189
        %v2191 = vsel %vm1769, %v2190, %v2186
        %v2192 = vlaneseq
        %v2193 = vshrl.u32 %v2192, 7
        %v2194 = vsub.s32 %v1759, %v2193
        %v2195 = vrot.slane %v2140, %v2194
        %v2196 = vlaneseq
        %v2197 = vshrl.u32 %v2196, 7
        %v2198 = vsub.s32 %v1764, %v2197
        %v2199 = vrot.slane %v2143, %v2198
        %v2200 = vsel %vm1769, %v2199, %v2195
        %v2201 = vlaneseq
        %v2202 = vshrl.u32 %v2201, 7
        %v2203 = vsub.s32 %v1759, %v2202
        %v2204 = vrot.slane %v2146, %v2203
        %v2205 = vlaneseq
        %v2206 = vshrl.u32 %v2205, 7
        %v2207 = vsub.s32 %v1764, %v2206
        %v2208 = vrot.slane %v2149, %v2207
        %v2209 = vsel %vm1769, %v2208, %v2204
        %v2210 = vlaneseq
        %v2211 = vshrl.u32 %v2210, 7
        %v2212 = vsub.s32 %v1759, %v2211
        %v2213 = vrot.slane %v2152, %v2212
        %v2214 = vlaneseq
        %v2215 = vshrl.u32 %v2214, 7
        %v2216 = vsub.s32 %v1764, %v2215
        %v2217 = vrot.slane %v2155, %v2216
        %v2218 = vsel %vm1769, %v2217, %v2213
        %v2219 = vlaneseq
        %v2220 = vshrl.u32 %v2219, 7
        %v2221 = vsub.s32 %v1759, %v2220
        %v2222 = vrot.slane %v2158, %v2221
        %v2223 = vlaneseq
        %v2224 = vshrl.u32 %v2223, 7
        %v2225 = vsub.s32 %v1764, %v2224
        %v2226 = vrot.slane %v2161, %v2225
        %v2227 = vsel %vm1769, %v2226, %v2222
        %v2228 = vlaneseq
        %v2229 = vshrl.u32 %v2228, 7
        %v2230 = vsub.s32 %v1759, %v2229
        %v2231 = vrot.slane %v2164, %v2230
        %v2232 = vlaneseq
        %v2233 = vshrl.u32 %v2232, 7
        %v2234 = vsub.s32 %v1764, %v2233
        %v2235 = vrot.slane %v2167, %v2234
        %v2236 = vsel %vm1769, %v2235, %v2231
        %v2237 = vlaneseq
        %v2238 = vshrl.u32 %v2237, 7
        %v2239 = vsub.s32 %v1759, %v2238
        %v2240 = vrot.slane %v2170, %v2239
        %v2241 = vlaneseq
        %v2242 = vshrl.u32 %v2241, 7
        %v2243 = vsub.s32 %v1764, %v2242
        %v2244 = vrot.slane %v2173, %v2243
        %v2245 = vsel %vm1769, %v2244, %v2240
        %v2246 = vsel %vm1834, %v2191, %v2182
        %v2247 = vsel %vm1836, %v2200, %v2246
        %v2248 = vsel %vm1838, %v2209, %v2247
        %v2249 = vsel %vm1840, %v2218, %v2248
        %v2250 = vsel %vm1842, %v2227, %v2249
        %v2251 = vsel %vm1844, %v2236, %v2250
        %v2252 = vsel %vm1846, %v2245, %v2251
        %v2254 = vmul.f32 %v2061, %v2252
        %v2255 = vadd.f32 %v2060, %v2254
        %v2256 = vsub.f32 0.0, %v2255
        %v2257 = vld [vmem:[%s586] sm:$0x1]
        %v2258 = vmul.f32 %v2256, %v617
        %v2259 = vsel %vm1849, %v2258, 0.0
        %2260 = vadd.xlane.f32.xlu0 %v2259
        %v2261 = vpop.xlane.xlu0 %2260
        %v2262 = vrot.slane %v2261, 4
        %v2263 = vadd.f32 %v2261, %v2262
        %v2264 = vrot.slane %v2263, 2
        %v2265 = vadd.f32 %v2263, %v2264
        %v2266 = vrot.slane %v2265, 1
        %v2267 = vadd.f32 %v2265, %v2266
        %s2268 = vtos %v2267
        %v2269 = vstv %s2268
        %v2270 = vadd.f32 %v2257, %v2269
        %vm2271 = vcmask 0
        %2272 = vst.msk [vmem:[%s586] sm:$0x1] %vm2271, %v2270
        %v2273 = vld [vmem:[%s589] sm:$0x1]
        %v2274 = vsel %vm1849, %v617, 0.0
        %2275 = vadd.xlane.f32.xlu0 %v2274
        %v2276 = vpop.xlane.xlu0 %2275
        %v2277 = vrot.slane %v2276, 4
        %v2278 = vadd.f32 %v2276, %v2277
        %v2279 = vrot.slane %v2278, 2
        %v2280 = vadd.f32 %v2278, %v2279
        %v2281 = vrot.slane %v2280, 1
        %v2282 = vadd.f32 %v2280, %v2281
        %s2283 = vtos %v2282
        %v2284 = vstv %s2283
        %v2285 = vadd.f32 %v2273, %v2284
        %2286 = vst.msk [vmem:[%s589] sm:$0x1] %vm2271, %v2285
        %s2287 = sand.u32 %s317, 1
        %s2288 = scalar_lea.sflag [#allocation4], %s2287
        %s2289 = sand.u32 %s317, 1
        %s2290 = smul.addr %s2289, 8
        %s2291 = scalar_lea.vmem [#allocation3], %s2290
        %p2292 = scmp.lt.s32.totalorder %s34, 1
        %s2293 = scalar_select %p2292, %s34, 1
        %s2294 = scalar_lea.vmem %s12, %s2293
        %p2295 = scmp.lt.s32.totalorder %s34, 1
        %s2296 = scalar_select %p2295, %s34, 1
        %s2297 = scalar_lea.vmem %s13, %s2296
        // Predicated region
        $region69: #{tan_forward.5} parent=63 // pred_check
          %p2298 = pneg %p327
        $region70: #{tan_forward.5} parent=63 // pred_check_branch
          %2300 = sbr.rel (%p2298) target = $region72
        $region71: #{tan_forward.5} parent=63 // pred_region
          %s2302 = ssub.s32 128, 128
          %2303 = vsyncadd %s2288, %s2302
          %s2304 = smul.addr %s34, 2
          %s2305 = sadd.s32 %s35, %s2304
          %s2306 = smul.addr %s2305, 128
          %s2307 = scalar_lea.hbm %s11, %s2306
          %s2309 = sshll.u32 %s2291, 4
          %s2310 = int_to_ptr.vmem [resolvable:$true] %s2309
          %2312 = dma.vmem_to_hbm [thread:$0]  %s2310, 128, %s2307, %s2288
        $region72: #{tan_forward.5} parent=63 // pred_fallthru
          _
        // Predicated region
        $region73: #{tan_forward.5} parent=63 // pred_check
          %p2313 = pneg %p353
        $region74: #{tan_forward.5} parent=63 // pred_check_branch
          %2315 = sbr.rel (%p2313) target = $region76
        $region75: #{tan_forward.5} parent=63 // pred_region
          _
        $region76: #{tan_forward.5} parent=63 // pred_fallthru
          _
        // Predicated region
        $region77: #{tan_forward.5} parent=63 // pred_check
          %p2316 = pneg %p379
        $region78: #{tan_forward.5} parent=63 // pred_check_branch
          %2318 = sbr.rel (%p2316) target = $region80
        $region79: #{tan_forward.5} parent=63 // pred_region
          _
        $region80: #{tan_forward.5} parent=63 // pred_fallthru
          _
      $region64: #{tan_forward.5} parent=5 // pred_fallthru
        _
      %p2319 = scmp.le.s32.totalorder 2, %s25
      // Predicated region
      $region81: #{tan_forward.5} parent=5 // pred_check
        %p2320 = pneg %p2319
      $region82: #{tan_forward.5} parent=5 // pred_check_branch
        %2322 = sbr.rel (%p2320) target = $region84
      $region83: #{tan_forward.5} parent=5 // pred_region
        %s2323 = ssub.s32 %s25, 2
        // Predicated region
        $region85: #{tan_forward.5} parent=83 // pred_check
          %p2324 = pneg %p333
        $region86: #{tan_forward.5} parent=83 // pred_check_branch
          %2326 = sbr.rel (%p2324) target = $region88
        $region87: #{tan_forward.5} parent=83 // pred_region
          %s2327 = sand.u32 %s318, 1
          %s2328 = scalar_lea.sflag [#allocation4], %s2327
          %s2329 = sand.u32 %s318, 1
          %s2330 = smul.addr %s2329, 8
          %s2331 = scalar_lea.vmem [#allocation3], %s2330
          %2332 = dma.done %s2328, 128
        $region88: #{tan_forward.5} parent=83 // pred_fallthru
          _
        // Predicated region
        $region89: #{tan_forward.5} parent=83 // pred_check
          %p2333 = pneg %p359
        $region90: #{tan_forward.5} parent=83 // pred_check_branch
          %2335 = sbr.rel (%p2333) target = $region92
        $region91: #{tan_forward.5} parent=83 // pred_region
          %p2336 = scmp.lt.s32.totalorder %s36, 1
          %s2337 = scalar_select %p2336, %s36, 1
          %s2338 = scalar_lea.vmem %s12, %s2337
        $region92: #{tan_forward.5} parent=83 // pred_fallthru
          _
        // Predicated region
        $region93: #{tan_forward.5} parent=83 // pred_check
          %p2339 = pneg %p385
        $region94: #{tan_forward.5} parent=83 // pred_check_branch
          %2341 = sbr.rel (%p2339) target = $region96
        $region95: #{tan_forward.5} parent=83 // pred_region
          %p2342 = scmp.lt.s32.totalorder %s36, 1
          %s2343 = scalar_select %p2342, %s36, 1
          %s2344 = scalar_lea.vmem %s13, %s2343
        $region96: #{tan_forward.5} parent=83 // pred_fallthru
          _
      $region84: #{tan_forward.5} parent=5 // pred_fallthru
        _
    $region6: #{tan_forward.5} parent=1 // loop_footer
      %s29 = sadd.s32 1, %s25
    $region7: #{tan_forward.5} parent=1 // loop_footer_branch
      %24 = sbr.rel target = $region3
    $region8: #{tan_forward.5} parent=1 // loop_exit
      _
    %2345 = vsyncpa [#allocation4], 1
    %s2346 = scalar_lea.sflag [#allocation4], 1
    %2347 = vsyncpa %s2346, 1

</llo_original>
